<compile_context>
chip_gen: v7x
topology: tpu7x:2x2x1
jax: 0.10.0
libtpu: 0.0.40
codegen_flags: <defaults>
</compile_context>

<pallas_src>
import numpy as np
import jax
import jax.numpy as jnp
from jax.experimental import pallas as pl
from jax.experimental.pallas import tpu as pltpu

NF = 32           # num_filters (module default is 128; small for the test)
N_SET2SET = 2     # processing_steps
OUT_SIZE = 1
N_NODES = 32
N_GRAPHS = 4
B_PAD = 8         # pad batch (graphs) to a full sublane group


def cggru_readout_kernel(x_ref, xt_ref, mt_ref,
                         wihq_ref, wihr_ref, whh_ref, bias_ref,
                         w1q_ref, w1r_ref, b1_ref, w2_ref, b2_ref,
                         out_ref):
    x = x_ref[...]            # [N, nf]
    xt = xt_ref[...]          # [nf, N]
    mt = mt_ref[...]          # [B, N]  one-hot graph->node membership
    wih_q = wihq_ref[...]     # [nf, 4nf]   (rows 0..nf-1 of W_ih^T)
    wih_r = wihr_ref[...]     # [nf, 4nf]   (rows nf..2nf-1 of W_ih^T)
    whh = whh_ref[...]        # [nf, 4nf]
    bias = bias_ref[...]      # [1, 4nf]    (= b_ih + b_hh, folded in wrapper)
    w1_q = w1q_ref[...]       # [nf, nf]
    w1_r = w1r_ref[...]       # [nf, nf]
    b1 = b1_ref[...]          # [1, nf]
    w2 = w2_ref[...]          # [nf, out]
    b2 = b2_ref[...]          # [1, out]

    nf = NF
    B = mt.shape[0]

    # LSTM state (num_layers=1); q_star kept split as (q, r), both start at 0.
    h = jnp.zeros((B, nf), jnp.float32)
    c = jnp.zeros((B, nf), jnp.float32)
    q = jnp.zeros((B, nf), jnp.float32)
    r = jnp.zeros((B, nf), jnp.float32)

    neg = jnp.float32(-1e30)

    for _ in range(N_SET2SET):
        # One LSTM step on q_star = [q, r] (PyTorch gate order: i, f, g, o).
        gates = (jnp.dot(q, wih_q, preferred_element_type=jnp.float32)
                 + jnp.dot(r, wih_r, preferred_element_type=jnp.float32)
                 + jnp.dot(h, whh, preferred_element_type=jnp.float32)
                 + bias)                                        # [B, 4nf]
        i_g = jax.nn.sigmoid(gates[:, 0 * nf:1 * nf])
        f_g = jax.nn.sigmoid(gates[:, 1 * nf:2 * nf])
        g_g = jnp.tanh(gates[:, 2 * nf:3 * nf])
        o_g = jax.nn.sigmoid(gates[:, 3 * nf:4 * nf])
        c = f_g * c + i_g * g_g
        h = o_g * jnp.tanh(c)
        q = h                                                   # [B, nf]

        # Attention scores for every (graph, node) pair: S[b, n] = q[b] . x[n]
        s = jnp.dot(q, xt, preferred_element_type=jnp.float32)  # [B, N]

        # Segment softmax == masked row-wise softmax over the lane (node) axis.
        masked = jnp.where(mt != 0.0, s, neg)                   # [B, N]
        rowmax = jnp.max(masked, axis=-1, keepdims=True)        # [B, 1]
        p = jnp.exp(masked - rowmax)                            # [B, N] (0 off-graph)
        rowsum = jnp.sum(p, axis=-1, keepdims=True)             # [B, 1]
        inv = pl.reciprocal(rowsum + 1e-16, approx=True)        # [B, 1]
        a = p * inv                                             # [B, N]

        # r = segment_csr(a * x, ptr)  ==  per-graph weighted sum of node feats.
        r = jnp.dot(a, x, preferred_element_type=jnp.float32)   # [B, nf]

    # out = lin2(relu(lin1(q_star)))  with q_star = [q, r].
    hidden = jnp.maximum(
        jnp.dot(q, w1_q, preferred_element_type=jnp.float32)
        + jnp.dot(r, w1_r, preferred_element_type=jnp.float32)
        + b1, 0.0)                                              # [B, nf]
    out = jnp.dot(hidden, w2, preferred_element_type=jnp.float32) + b2
    out_ref[...] = out


def cggru_readout(x, batch, params):
    """x: [N, nf] float32, batch: [N] int32 (sorted graph ids)."""
    wih, whh, bih, bhh, w1, b1, w2, b2 = params

    # One-hot graph->node membership, padded to B_PAD sublanes (extra rows = 0).
    Mt = (batch[None, :] == jnp.arange(B_PAD, dtype=batch.dtype)[:, None]
          ).astype(jnp.float32)                                 # [B_PAD, N]
    xt = x.T                                                    # [nf, N]

    # Fold biases and split the q_star-facing weights once, outside the kernel.
    bias = bih + bhh                                            # [1, 4nf]
    wih_q, wih_r = wih[:NF, :], wih[NF:, :]                     # [nf, 4nf] each
    w1_q, w1_r = w1[:NF, :], w1[NF:, :]                         # [nf, nf]  each

    vmem_spec = pl.BlockSpec(memory_space=pltpu.MemorySpace.VMEM)
    out = pl.pallas_call(
        cggru_readout_kernel,
        out_shape=jax.ShapeDtypeStruct((B_PAD, OUT_SIZE), jnp.float32),
        in_specs=[vmem_spec] * 12,
        out_specs=vmem_spec,
    )(x, xt, Mt, wih_q, wih_r, whh, bias, w1_q, w1_r, b1, w2, b2)
    return out[:N_GRAPHS]


def reference(x, batch, params):
    """Pure-JAX reference reproducing the PyTorch forward."""
    wih, whh, bih, bhh, w1, b1, w2, b2 = params
    nf = NF
    B = N_GRAPHS
    h = jnp.zeros((B, nf), jnp.float32)
    c = jnp.zeros((B, nf), jnp.float32)
    q_star = jnp.zeros((B, 2 * nf), jnp.float32)
    for _ in range(N_SET2SET):
        gates = q_star @ wih + h @ whh + bih + bhh
        i_g = jax.nn.sigmoid(gates[:, :nf])
        f_g = jax.nn.sigmoid(gates[:, nf:2 * nf])
        g_g = jnp.tanh(gates[:, 2 * nf:3 * nf])
        o_g = jax.nn.sigmoid(gates[:, 3 * nf:])
        c = f_g * c + i_g * g_g
        h = o_g * jnp.tanh(c)
        q = h
        e = jnp.sum(x * q[batch], axis=-1)
        emax = jax.ops.segment_max(e, batch, num_segments=B)
        expe = jnp.exp(e - emax[batch])
        esum = jax.ops.segment_sum(expe, batch, num_segments=B)
        a = expe / (esum[batch] + 1e-16)
        r = jax.ops.segment_sum(a[:, None] * x, batch, num_segments=B)
        q_star = jnp.concatenate([q, r], axis=-1)
    hid = jax.nn.relu(q_star @ w1 + b1)
    return hid @ w2 + b2


def make_params(key):
    ks = jax.random.split(key, 8)
    scale = 0.1
    wih = scale * jax.random.normal(ks[0], (2 * NF, 4 * NF), jnp.float32)  # LSTM W_ih^T
    whh = scale * jax.random.normal(ks[1], (NF, 4 * NF), jnp.float32)      # LSTM W_hh^T
    bih = scale * jax.random.normal(ks[2], (1, 4 * NF), jnp.float32)
    bhh = scale * jax.random.normal(ks[3], (1, 4 * NF), jnp.float32)
    w1 = scale * jax.random.normal(ks[4], (2 * NF, NF), jnp.float32)       # lin1 W^T
    b1 = scale * jax.random.normal(ks[5], (1, NF), jnp.float32)
    w2 = scale * jax.random.normal(ks[6], (NF, OUT_SIZE), jnp.float32)     # lin2 W^T
    b2 = scale * jax.random.normal(ks[7], (1, OUT_SIZE), jnp.float32)
    return (wih, whh, bih, bhh, w1, b1, w2, b2)


if __name__ == "__main__":
    key = jax.random.PRNGKey(0)
    kx, kp = jax.random.split(key)
    x = jax.random.normal(kx, (N_NODES, NF), jnp.float32)
    # sorted node->graph assignment, N_NODES // N_GRAPHS nodes per graph
    batch = jnp.repeat(jnp.arange(N_GRAPHS, dtype=jnp.int32), N_NODES // N_GRAPHS)
    params = make_params(kp)

    out = cggru_readout(x, batch, params)
    out = jax.block_until_ready(out)

    ref = jax.block_until_ready(reference(x, batch, params))
    assert out.shape == (N_GRAPHS, OUT_SIZE)
    # Tolerance accounts for the approx EUP reciprocal in the softmax denominator.
    assert np.allclose(np.asarray(out), np.asarray(ref), rtol=2e-3, atol=2e-3), (
        np.max(np.abs(np.asarray(out) - np.asarray(ref))))
    print("KERNEL_OK")
</pallas_src>

<mosaic_0001>
module attributes {stable_mosaic.version = 11 : i64} {
  func.func @cggru_readout_kernel(%arg0: memref<32x32xf32, #tpu.memory_space<vmem>>, %arg1: memref<32x32xf32, #tpu.memory_space<vmem>>, %arg2: memref<8x32xf32, #tpu.memory_space<vmem>>, %arg3: memref<32x128xf32, #tpu.memory_space<vmem>>, %arg4: memref<32x128xf32, #tpu.memory_space<vmem>>, %arg5: memref<32x128xf32, #tpu.memory_space<vmem>>, %arg6: memref<1x128xf32, #tpu.memory_space<vmem>>, %arg7: memref<32x32xf32, #tpu.memory_space<vmem>>, %arg8: memref<32x32xf32, #tpu.memory_space<vmem>>, %arg9: memref<1x32xf32, #tpu.memory_space<vmem>>, %arg10: memref<32x1xf32, #tpu.memory_space<vmem>>, %arg11: memref<1x1xf32, #tpu.memory_space<vmem>>, %arg12: memref<8x1xf32, #tpu.memory_space<vmem>>) attributes {dimension_semantics = [], scalar_prefetch = 0 : i64, scratch_operands = 0 : i64, tpu.core_type = #tpu.core_type<tc>} {
    %c0 = arith.constant 0 : index
    %c0_0 = arith.constant 0 : index
    %0 = vector.load %arg0[%c0, %c0_0] : memref<32x32xf32, #tpu.memory_space<vmem>>, vector<32x32xf32>
    %c0_1 = arith.constant 0 : index
    %c0_2 = arith.constant 0 : index
    %1 = vector.load %arg1[%c0_1, %c0_2] : memref<32x32xf32, #tpu.memory_space<vmem>>, vector<32x32xf32>
    %c0_3 = arith.constant 0 : index
    %c0_4 = arith.constant 0 : index
    %2 = vector.load %arg2[%c0_3, %c0_4] : memref<8x32xf32, #tpu.memory_space<vmem>>, vector<8x32xf32>
    %c0_5 = arith.constant 0 : index
    %c0_6 = arith.constant 0 : index
    %3 = vector.load %arg3[%c0_5, %c0_6] : memref<32x128xf32, #tpu.memory_space<vmem>>, vector<32x128xf32>
    %c0_7 = arith.constant 0 : index
    %c0_8 = arith.constant 0 : index
    %4 = vector.load %arg4[%c0_7, %c0_8] : memref<32x128xf32, #tpu.memory_space<vmem>>, vector<32x128xf32>
    %c0_9 = arith.constant 0 : index
    %c0_10 = arith.constant 0 : index
    %5 = vector.load %arg5[%c0_9, %c0_10] : memref<32x128xf32, #tpu.memory_space<vmem>>, vector<32x128xf32>
    %c0_11 = arith.constant 0 : index
    %c0_12 = arith.constant 0 : index
    %6 = vector.load %arg6[%c0_11, %c0_12] : memref<1x128xf32, #tpu.memory_space<vmem>>, vector<1x128xf32>
    %c0_13 = arith.constant 0 : index
    %c0_14 = arith.constant 0 : index
    %7 = vector.load %arg7[%c0_13, %c0_14] : memref<32x32xf32, #tpu.memory_space<vmem>>, vector<32x32xf32>
    %c0_15 = arith.constant 0 : index
    %c0_16 = arith.constant 0 : index
    %8 = vector.load %arg8[%c0_15, %c0_16] : memref<32x32xf32, #tpu.memory_space<vmem>>, vector<32x32xf32>
    %c0_17 = arith.constant 0 : index
    %c0_18 = arith.constant 0 : index
    %9 = vector.load %arg9[%c0_17, %c0_18] : memref<1x32xf32, #tpu.memory_space<vmem>>, vector<1x32xf32>
    %c0_19 = arith.constant 0 : index
    %c0_20 = arith.constant 0 : index
    %10 = vector.load %arg10[%c0_19, %c0_20] : memref<32x1xf32, #tpu.memory_space<vmem>>, vector<32x1xf32>
    %c0_21 = arith.constant 0 : index
    %c0_22 = arith.constant 0 : index
    %11 = vector.load %arg11[%c0_21, %c0_22] : memref<1x1xf32, #tpu.memory_space<vmem>>, vector<1x1xf32>
    %cst = arith.constant 0.000000e+00 : f32
    %12 = vector.broadcast %cst : f32 to vector<8x32xf32>
    %cst_23 = arith.constant 0.000000e+00 : f32
    %13 = vector.broadcast %cst_23 : f32 to vector<8x32xf32>
    %cst_24 = arith.constant 0.000000e+00 : f32
    %14 = vector.broadcast %cst_24 : f32 to vector<8x32xf32>
    %cst_25 = arith.constant 0.000000e+00 : f32
    %15 = vector.broadcast %cst_25 : f32 to vector<8x32xf32>
    %cst_26 = arith.constant dense<0.000000e+00> : vector<8x128xf32>
    %16 = tpu.matmul %14, %3, %cst_26 {dimension_numbers = #tpu.dot_dimension_numbers<[1], [0], [0], [1], [0, 0, 1, 1], [], []>} : vector<8x32xf32>, vector<32x128xf32>, vector<8x128xf32> -> vector<8x128xf32>
    %cst_27 = arith.constant dense<0.000000e+00> : vector<8x128xf32>
    %17 = tpu.matmul %15, %4, %cst_27 {dimension_numbers = #tpu.dot_dimension_numbers<[1], [0], [0], [1], [0, 0, 1, 1], [], []>} : vector<8x32xf32>, vector<32x128xf32>, vector<8x128xf32> -> vector<8x128xf32>
    %18 = arith.addf %16, %17 : vector<8x128xf32>
    %cst_28 = arith.constant dense<0.000000e+00> : vector<8x128xf32>
    %19 = tpu.matmul %12, %5, %cst_28 {dimension_numbers = #tpu.dot_dimension_numbers<[1], [0], [0], [1], [0, 0, 1, 1], [], []>} : vector<8x32xf32>, vector<32x128xf32>, vector<8x128xf32> -> vector<8x128xf32>
    %20 = arith.addf %18, %19 : vector<8x128xf32>
    %21 = vector.broadcast %6 : vector<1x128xf32> to vector<8x128xf32>
    %22 = arith.addf %20, %21 : vector<8x128xf32>
    %23 = vector.extract_strided_slice %22 {offsets = [0, 0], sizes = [8, 32], strides = [1, 1]} : vector<8x128xf32> to vector<8x32xf32>
    %24 = arith.negf %23 : vector<8x32xf32>
    %25 = math.exp %24 : vector<8x32xf32>
    %cst_29 = arith.constant 1.000000e+00 : f32
    %26 = vector.broadcast %cst_29 : f32 to vector<8x32xf32>
    %27 = arith.addf %26, %25 : vector<8x32xf32>
    %28 = arith.divf %26, %27 : vector<8x32xf32>
    %29 = vector.extract_strided_slice %22 {offsets = [0, 32], sizes = [8, 32], strides = [1, 1]} : vector<8x128xf32> to vector<8x32xf32>
    %30 = arith.negf %29 : vector<8x32xf32>
    %31 = math.exp %30 : vector<8x32xf32>
    %cst_30 = arith.constant 1.000000e+00 : f32
    %32 = vector.broadcast %cst_30 : f32 to vector<8x32xf32>
    %33 = arith.addf %32, %31 : vector<8x32xf32>
    %34 = arith.divf %32, %33 : vector<8x32xf32>
    %35 = vector.extract_strided_slice %22 {offsets = [0, 64], sizes = [8, 32], strides = [1, 1]} : vector<8x128xf32> to vector<8x32xf32>
    %36 = math.tanh %35 : vector<8x32xf32>
    %37 = vector.extract_strided_slice %22 {offsets = [0, 96], sizes = [8, 32], strides = [1, 1]} : vector<8x128xf32> to vector<8x32xf32>
    %38 = arith.negf %37 : vector<8x32xf32>
    %39 = math.exp %38 : vector<8x32xf32>
    %cst_31 = arith.constant 1.000000e+00 : f32
    %40 = vector.broadcast %cst_31 : f32 to vector<8x32xf32>
    %41 = arith.addf %40, %39 : vector<8x32xf32>
    %42 = arith.divf %40, %41 : vector<8x32xf32>
    %43 = arith.mulf %34, %13 : vector<8x32xf32>
    %44 = arith.mulf %28, %36 : vector<8x32xf32>
    %45 = arith.addf %43, %44 : vector<8x32xf32>
    %46 = math.tanh %45 : vector<8x32xf32>
    %47 = arith.mulf %42, %46 : vector<8x32xf32>
    %cst_32 = arith.constant dense<0.000000e+00> : vector<8x32xf32>
    %48 = tpu.matmul %47, %1, %cst_32 {dimension_numbers = #tpu.dot_dimension_numbers<[1], [0], [0], [1], [0, 0, 1, 1], [], []>} : vector<8x32xf32>, vector<32x32xf32>, vector<8x32xf32> -> vector<8x32xf32>
    %cst_33 = arith.constant 0.000000e+00 : f32
    %49 = vector.broadcast %cst_33 : f32 to vector<8x32xf32>
    %50 = arith.cmpf one, %2, %49 : vector<8x32xf32>
    %cst_34 = arith.constant -1.000000e+30 : f32
    %51 = vector.broadcast %cst_34 : f32 to vector<8x32xf32>
    %52 = arith.select %50, %48, %51 : vector<8x32xi1>, vector<8x32xf32>
    %cst_35 = arith.constant dense<0xFF800000> : vector<8xf32>
    %53 = vector.multi_reduction <maximumf>, %52, %cst_35 [1] : vector<8x32xf32> to vector<8xf32>
    %54 = vector.shape_cast %53 : vector<8xf32> to vector<8x1xf32>
    %55 = vector.broadcast %54 : vector<8x1xf32> to vector<8x32xf32>
    %56 = arith.subf %52, %55 : vector<8x32xf32>
    %57 = math.exp %56 : vector<8x32xf32>
    %cst_36 = arith.constant dense<0.000000e+00> : vector<8xf32>
    %58 = vector.multi_reduction <add>, %57, %cst_36 [1] : vector<8x32xf32> to vector<8xf32>
    %59 = vector.shape_cast %58 : vector<8xf32> to vector<8x1xf32>
    %cst_37 = arith.constant 1.000000e-16 : f32
    %60 = vector.broadcast %cst_37 : f32 to vector<8x1xf32>
    %61 = arith.addf %59, %60 : vector<8x1xf32>
    %62 = tpu.reciprocal %61 {approx = true} : vector<8x1xf32> -> vector<8x1xf32>
    %63 = vector.broadcast %62 : vector<8x1xf32> to vector<8x32xf32>
    %64 = arith.mulf %57, %63 : vector<8x32xf32>
    %cst_38 = arith.constant dense<0.000000e+00> : vector<8x32xf32>
    %65 = tpu.matmul %64, %0, %cst_38 {dimension_numbers = #tpu.dot_dimension_numbers<[1], [0], [0], [1], [0, 0, 1, 1], [], []>} : vector<8x32xf32>, vector<32x32xf32>, vector<8x32xf32> -> vector<8x32xf32>
    %cst_39 = arith.constant dense<0.000000e+00> : vector<8x128xf32>
    %66 = tpu.matmul %47, %3, %cst_39 {dimension_numbers = #tpu.dot_dimension_numbers<[1], [0], [0], [1], [0, 0, 1, 1], [], []>} : vector<8x32xf32>, vector<32x128xf32>, vector<8x128xf32> -> vector<8x128xf32>
    %cst_40 = arith.constant dense<0.000000e+00> : vector<8x128xf32>
    %67 = tpu.matmul %65, %4, %cst_40 {dimension_numbers = #tpu.dot_dimension_numbers<[1], [0], [0], [1], [0, 0, 1, 1], [], []>} : vector<8x32xf32>, vector<32x128xf32>, vector<8x128xf32> -> vector<8x128xf32>
    %68 = arith.addf %66, %67 : vector<8x128xf32>
    %cst_41 = arith.constant dense<0.000000e+00> : vector<8x128xf32>
    %69 = tpu.matmul %47, %5, %cst_41 {dimension_numbers = #tpu.dot_dimension_numbers<[1], [0], [0], [1], [0, 0, 1, 1], [], []>} : vector<8x32xf32>, vector<32x128xf32>, vector<8x128xf32> -> vector<8x128xf32>
    %70 = arith.addf %68, %69 : vector<8x128xf32>
    %71 = vector.broadcast %6 : vector<1x128xf32> to vector<8x128xf32>
    %72 = arith.addf %70, %71 : vector<8x128xf32>
    %73 = vector.extract_strided_slice %72 {offsets = [0, 0], sizes = [8, 32], strides = [1, 1]} : vector<8x128xf32> to vector<8x32xf32>
    %74 = arith.negf %73 : vector<8x32xf32>
    %75 = math.exp %74 : vector<8x32xf32>
    %cst_42 = arith.constant 1.000000e+00 : f32
    %76 = vector.broadcast %cst_42 : f32 to vector<8x32xf32>
    %77 = arith.addf %76, %75 : vector<8x32xf32>
    %78 = arith.divf %76, %77 : vector<8x32xf32>
    %79 = vector.extract_strided_slice %72 {offsets = [0, 32], sizes = [8, 32], strides = [1, 1]} : vector<8x128xf32> to vector<8x32xf32>
    %80 = arith.negf %79 : vector<8x32xf32>
    %81 = math.exp %80 : vector<8x32xf32>
    %cst_43 = arith.constant 1.000000e+00 : f32
    %82 = vector.broadcast %cst_43 : f32 to vector<8x32xf32>
    %83 = arith.addf %82, %81 : vector<8x32xf32>
    %84 = arith.divf %82, %83 : vector<8x32xf32>
    %85 = vector.extract_strided_slice %72 {offsets = [0, 64], sizes = [8, 32], strides = [1, 1]} : vector<8x128xf32> to vector<8x32xf32>
    %86 = math.tanh %85 : vector<8x32xf32>
    %87 = vector.extract_strided_slice %72 {offsets = [0, 96], sizes = [8, 32], strides = [1, 1]} : vector<8x128xf32> to vector<8x32xf32>
    %88 = arith.negf %87 : vector<8x32xf32>
    %89 = math.exp %88 : vector<8x32xf32>
    %cst_44 = arith.constant 1.000000e+00 : f32
    %90 = vector.broadcast %cst_44 : f32 to vector<8x32xf32>
    %91 = arith.addf %90, %89 : vector<8x32xf32>
    %92 = arith.divf %90, %91 : vector<8x32xf32>
    %93 = arith.mulf %84, %45 : vector<8x32xf32>
    %94 = arith.mulf %78, %86 : vector<8x32xf32>
    %95 = arith.addf %93, %94 : vector<8x32xf32>
    %96 = math.tanh %95 : vector<8x32xf32>
    %97 = arith.mulf %92, %96 : vector<8x32xf32>
    %cst_45 = arith.constant dense<0.000000e+00> : vector<8x32xf32>
    %98 = tpu.matmul %97, %1, %cst_45 {dimension_numbers = #tpu.dot_dimension_numbers<[1], [0], [0], [1], [0, 0, 1, 1], [], []>} : vector<8x32xf32>, vector<32x32xf32>, vector<8x32xf32> -> vector<8x32xf32>
    %cst_46 = arith.constant 0.000000e+00 : f32
    %99 = vector.broadcast %cst_46 : f32 to vector<8x32xf32>
    %100 = arith.cmpf one, %2, %99 : vector<8x32xf32>
    %cst_47 = arith.constant -1.000000e+30 : f32
    %101 = vector.broadcast %cst_47 : f32 to vector<8x32xf32>
    %102 = arith.select %100, %98, %101 : vector<8x32xi1>, vector<8x32xf32>
    %cst_48 = arith.constant dense<0xFF800000> : vector<8xf32>
    %103 = vector.multi_reduction <maximumf>, %102, %cst_48 [1] : vector<8x32xf32> to vector<8xf32>
    %104 = vector.shape_cast %103 : vector<8xf32> to vector<8x1xf32>
    %105 = vector.broadcast %104 : vector<8x1xf32> to vector<8x32xf32>
    %106 = arith.subf %102, %105 : vector<8x32xf32>
    %107 = math.exp %106 : vector<8x32xf32>
    %cst_49 = arith.constant dense<0.000000e+00> : vector<8xf32>
    %108 = vector.multi_reduction <add>, %107, %cst_49 [1] : vector<8x32xf32> to vector<8xf32>
    %109 = vector.shape_cast %108 : vector<8xf32> to vector<8x1xf32>
    %cst_50 = arith.constant 1.000000e-16 : f32
    %110 = vector.broadcast %cst_50 : f32 to vector<8x1xf32>
    %111 = arith.addf %109, %110 : vector<8x1xf32>
    %112 = tpu.reciprocal %111 {approx = true} : vector<8x1xf32> -> vector<8x1xf32>
    %113 = vector.broadcast %112 : vector<8x1xf32> to vector<8x32xf32>
    %114 = arith.mulf %107, %113 : vector<8x32xf32>
    %cst_51 = arith.constant dense<0.000000e+00> : vector<8x32xf32>
    %115 = tpu.matmul %114, %0, %cst_51 {dimension_numbers = #tpu.dot_dimension_numbers<[1], [0], [0], [1], [0, 0, 1, 1], [], []>} : vector<8x32xf32>, vector<32x32xf32>, vector<8x32xf32> -> vector<8x32xf32>
    %cst_52 = arith.constant dense<0.000000e+00> : vector<8x32xf32>
    %116 = tpu.matmul %97, %7, %cst_52 {dimension_numbers = #tpu.dot_dimension_numbers<[1], [0], [0], [1], [0, 0, 1, 1], [], []>} : vector<8x32xf32>, vector<32x32xf32>, vector<8x32xf32> -> vector<8x32xf32>
    %cst_53 = arith.constant dense<0.000000e+00> : vector<8x32xf32>
    %117 = tpu.matmul %115, %8, %cst_53 {dimension_numbers = #tpu.dot_dimension_numbers<[1], [0], [0], [1], [0, 0, 1, 1], [], []>} : vector<8x32xf32>, vector<32x32xf32>, vector<8x32xf32> -> vector<8x32xf32>
    %118 = arith.addf %116, %117 : vector<8x32xf32>
    %119 = vector.broadcast %9 : vector<1x32xf32> to vector<8x32xf32>
    %120 = arith.addf %118, %119 : vector<8x32xf32>
    %cst_54 = arith.constant 0.000000e+00 : f32
    %121 = vector.broadcast %cst_54 : f32 to vector<8x32xf32>
    %122 = arith.maximumf %120, %121 : vector<8x32xf32>
    %cst_55 = arith.constant dense<0.000000e+00> : vector<8x1xf32>
    %123 = tpu.matmul %122, %10, %cst_55 {dimension_numbers = #tpu.dot_dimension_numbers<[1], [0], [0], [1], [0, 0, 1, 1], [], []>} : vector<8x32xf32>, vector<32x1xf32>, vector<8x1xf32> -> vector<8x1xf32>
    %124 = vector.broadcast %11 : vector<1x1xf32> to vector<8x1xf32>
    %125 = arith.addf %123, %124 : vector<8x1xf32>
    %c0_56 = arith.constant 0 : index
    %c0_57 = arith.constant 0 : index
    %126 = vector.load %arg12[%c0_56, %c0_57] : memref<8x1xf32, #tpu.memory_space<vmem>>, vector<8x1xf32>
    tpu.vector_store %arg12[%c0_56, %c0_57], %125 {strides = array<i32>} : memref<8x1xf32, #tpu.memory_space<vmem>>, vector<8x1xf32>,
    return
  }
}

</mosaic_0001>

<llo_original>
// kernel: tpu_custom_call.1
$region0: #{tpu_custom_call.1}
  #allocation0 [shape = 'u32[]', space=smem, size = 0x4, offset = 0x4, fixed_abs, tag = 'smem constant byte address 0x4 - core index']
  #allocation1 [shape = 'u32[144,128]{1,0:T(1,128)}', space=vmem, size = 0x12000, scoped, tag = 'internal scratch']
  #allocation2 [shape = 'f32[1,1]{1,0:T(1,128)S(1)}', space=vmem, size = 0x200, scoped, tag = 'scoped memory for tpu_custom_call.1']
  %s0 = inlined_call_operand.vmem [shape: f32[32,32], index: 0, kind: input, shape index: {}]
  %s1 = inlined_call_operand.hbm [shape: f32[32,32], index: 1, kind: input, shape index: {}]
  %s2 = inlined_call_operand.hbm [shape: f32[8,32], index: 2, kind: input, shape index: {}]
  %s3 = inlined_call_operand.hbm [shape: f32[32,128], index: 3, kind: input, shape index: {}]
  %s4 = inlined_call_operand.hbm [shape: f32[32,128], index: 4, kind: input, shape index: {}]
  %s5 = inlined_call_operand.hbm [shape: f32[32,128], index: 5, kind: input, shape index: {}]
  %s6 = inlined_call_operand.vmem [shape: f32[1,128], index: 6, kind: input, shape index: {}]
  %s7 = inlined_call_operand.hbm [shape: f32[32,32], index: 7, kind: input, shape index: {}]
  %s8 = inlined_call_operand.vmem [shape: f32[32,32], index: 8, kind: input, shape index: {}]
  %s9 = inlined_call_operand.vmem [shape: f32[1,32], index: 9, kind: input, shape index: {}]
  %s10 = inlined_call_operand.vmem [shape: f32[32,1], index: 10, kind: input, shape index: {}]
  %s11 = inlined_call_operand.<no memory space> [shape: f32[1,1], index: 11, kind: input, shape index: {}]
  %s12 = inlined_call_operand.vmem [shape: f32[8,1], index: 12, kind: output, shape index: {}]
  %s13 = sld [smem:[#allocation0]]
  $region82: #{tpu_custom_call.1} parent=0
    _
  %s15 = ssub.s32 1, %s13
  %s16 = scalar_select 0, %s15, %s13
  %v17 = vstv %s11
  %18 = vst [vmem:[#allocation2] sm:$0x1] %v17
  $region1: #{tpu_custom_call.1} parent=0
    #allocation3 [shape = 'u8[16384]{0}', space=vmem, size = 0x4000, scoped, tag = 'input window, operand 1, single buffered']
    #allocation4 [shape = 's32[1]{0}', space=sflag, size = 0x4, scoped, tag = 'scoped memory for tpu_custom_call.1']
    #allocation5 [shape = 'u8[4096]{0}', space=vmem, size = 0x1000, scoped, tag = 'input window, operand 2, single buffered']
    #allocation6 [shape = 's32[1]{0}', space=sflag, size = 0x4, scoped, tag = 'scoped memory for tpu_custom_call.1']
    #allocation7 [shape = 'u8[16384]{0}', space=vmem, size = 0x4000, scoped, tag = 'input window, operand 3, single buffered']
    #allocation8 [shape = 'u8[16384]{0}', space=vmem, size = 0x4000, scoped, tag = 'input window, operand 4, single buffered']
    #allocation9 [shape = 's32[1]{0}', space=sflag, size = 0x4, scoped, tag = 'scoped memory for tpu_custom_call.1']
    #allocation10 [shape = 'u8[16384]{0}', space=vmem, size = 0x4000, scoped, tag = 'input window, operand 5, single buffered']
    #allocation11 [shape = 'u8[16384]{0}', space=vmem, size = 0x4000, scoped, tag = 'input window, operand 7, single buffered']
    #allocation12 [shape = 's32[1]{0}', space=sflag, size = 0x4, scoped, tag = 'scoped memory for tpu_custom_call.1']
    %19 = vsyncpa [#allocation4], 0
    %20 = vsyncpa [#allocation6], 0
    %21 = vsyncpa [#allocation9], 0
    %22 = vsyncpa [#allocation12], 0
    // Predicated region
    $region2: #{tpu_custom_call.1} parent=1 // pred_check
      _
    $region3: #{tpu_custom_call.1} parent=1 // pred_check_branch
      %24 = sbr.rel (0) target = $region5
    $region4: #{tpu_custom_call.1} parent=1 // pred_region
      _
    $region5: #{tpu_custom_call.1} parent=1 // pred_fallthru
      _
    // Predicated region
    $region6: #{tpu_custom_call.1} parent=1 // pred_check
      _
    $region7: #{tpu_custom_call.1} parent=1 // pred_check_branch
      %26 = sbr.rel (0) target = $region9
    $region8: #{tpu_custom_call.1} parent=1 // pred_region
      %s28 = ssub.s32 512, 512
      %29 = vsyncadd [#allocation4], %s28
      %s30 = sshll.u32 [#allocation3], 4
      %s31 = int_to_ptr.vmem [resolvable:$true] %s30
      %36 = dma.hbm_to_vmem [thread:$0]  %s1, 512, %s31, [#allocation4], 128, 128, 8
    $region9: #{tpu_custom_call.1} parent=1 // pred_fallthru
      _
    // Predicated region
    $region10: #{tpu_custom_call.1} parent=1 // pred_check
      _
    $region11: #{tpu_custom_call.1} parent=1 // pred_check_branch
      %38 = sbr.rel (0) target = $region13
    $region12: #{tpu_custom_call.1} parent=1 // pred_region
      %s40 = ssub.s32 128, 128
      %41 = vsyncadd [#allocation6], %s40
      %s43 = sshll.u32 [#allocation5], 4
      %s44 = int_to_ptr.vmem [resolvable:$true] %s43
      %46 = dma.hbm_to_vmem [thread:$0]  %s2, 128, %s44, [#allocation6]
    $region13: #{tpu_custom_call.1} parent=1 // pred_fallthru
      _
    // Predicated region
    $region14: #{tpu_custom_call.1} parent=1 // pred_check
      _
    $region15: #{tpu_custom_call.1} parent=1 // pred_check_branch
      %48 = sbr.rel (0) target = $region17
    $region16: #{tpu_custom_call.1} parent=1 // pred_region
      %s50 = ssub.s32 512, 512
      %51 = vsyncadd [#allocation6], %s50
      %s52 = sshll.u32 [#allocation7], 4
      %s53 = int_to_ptr.vmem [resolvable:$true] %s52
      %58 = dma.hbm_to_vmem [thread:$0]  %s3, 512, %s53, [#allocation6], 128, 128, 8
    $region17: #{tpu_custom_call.1} parent=1 // pred_fallthru
      _
    // Predicated region
    $region18: #{tpu_custom_call.1} parent=1 // pred_check
      _
    $region19: #{tpu_custom_call.1} parent=1 // pred_check_branch
      %60 = sbr.rel (0) target = $region21
    $region20: #{tpu_custom_call.1} parent=1 // pred_region
      %s62 = ssub.s32 512, 512
      %63 = vsyncadd [#allocation9], %s62
      %s64 = sshll.u32 [#allocation8], 4
      %s65 = int_to_ptr.vmem [resolvable:$true] %s64
      %70 = dma.hbm_to_vmem [thread:$0]  %s4, 512, %s65, [#allocation9], 128, 128, 8
    $region21: #{tpu_custom_call.1} parent=1 // pred_fallthru
      _
    // Predicated region
    $region22: #{tpu_custom_call.1} parent=1 // pred_check
      _
    $region23: #{tpu_custom_call.1} parent=1 // pred_check_branch
      %72 = sbr.rel (0) target = $region25
    $region24: #{tpu_custom_call.1} parent=1 // pred_region
      %s74 = ssub.s32 512, 512
      %75 = vsyncadd [#allocation9], %s74
      %s76 = sshll.u32 [#allocation10], 4
      %s77 = int_to_ptr.vmem [resolvable:$true] %s76
      %82 = dma.hbm_to_vmem [thread:$0]  %s5, 512, %s77, [#allocation9], 128, 128, 8
    $region25: #{tpu_custom_call.1} parent=1 // pred_fallthru
      _
    // Predicated region
    $region26: #{tpu_custom_call.1} parent=1 // pred_check
      _
    $region27: #{tpu_custom_call.1} parent=1 // pred_check_branch
      %84 = sbr.rel (0) target = $region29
    $region28: #{tpu_custom_call.1} parent=1 // pred_region
      _
    $region29: #{tpu_custom_call.1} parent=1 // pred_fallthru
      _
    // Predicated region
    $region30: #{tpu_custom_call.1} parent=1 // pred_check
      _
    $region31: #{tpu_custom_call.1} parent=1 // pred_check_branch
      %86 = sbr.rel (0) target = $region33
    $region32: #{tpu_custom_call.1} parent=1 // pred_region
      %s88 = ssub.s32 512, 512
      %89 = vsyncadd [#allocation12], %s88
      %s90 = sshll.u32 [#allocation11], 4
      %s91 = int_to_ptr.vmem [resolvable:$true] %s90
      %96 = dma.hbm_to_vmem [thread:$0]  %s7, 512, %s91, [#allocation12], 128, 128, 8
    $region33: #{tpu_custom_call.1} parent=1 // pred_fallthru
      _
    // Predicated region
    $region34: #{tpu_custom_call.1} parent=1 // pred_check
      _
    $region35: #{tpu_custom_call.1} parent=1 // pred_check_branch
      %98 = sbr.rel (0) target = $region37
    $region36: #{tpu_custom_call.1} parent=1 // pred_region
      _
    $region37: #{tpu_custom_call.1} parent=1 // pred_fallthru
      _
    // Predicated region
    $region38: #{tpu_custom_call.1} parent=1 // pred_check
      _
    $region39: #{tpu_custom_call.1} parent=1 // pred_check_branch
      %100 = sbr.rel (0) target = $region41
    $region40: #{tpu_custom_call.1} parent=1 // pred_region
      _
    $region41: #{tpu_custom_call.1} parent=1 // pred_fallthru
      _
    // Predicated region
    $region42: #{tpu_custom_call.1} parent=1 // pred_check
      _
    $region43: #{tpu_custom_call.1} parent=1 // pred_check_branch
      %102 = sbr.rel (0) target = $region45
    $region44: #{tpu_custom_call.1} parent=1 // pred_region
      _
    $region45: #{tpu_custom_call.1} parent=1 // pred_fallthru
      _
    // Predicated region
    $region46: #{tpu_custom_call.1} parent=1 // pred_check
      _
    $region47: #{tpu_custom_call.1} parent=1 // pred_check_branch
      %104 = sbr.rel (0) target = $region49
    $region48: #{tpu_custom_call.1} parent=1 // pred_region
      _
    $region49: #{tpu_custom_call.1} parent=1 // pred_fallthru
      _
    // Predicated region
    $region50: #{tpu_custom_call.1} parent=1 // pred_check
      _
    $region51: #{tpu_custom_call.1} parent=1 // pred_check_branch
      %106 = sbr.rel (0) target = $region53
    $region52: #{tpu_custom_call.1} parent=1 // pred_region
      %107 = dma.done [#allocation4], 512
    $region53: #{tpu_custom_call.1} parent=1 // pred_fallthru
      _
    // Predicated region
    $region54: #{tpu_custom_call.1} parent=1 // pred_check
      _
    $region55: #{tpu_custom_call.1} parent=1 // pred_check_branch
      %109 = sbr.rel (0) target = $region57
    $region56: #{tpu_custom_call.1} parent=1 // pred_region
      %110 = dma.done [#allocation6], 128
    $region57: #{tpu_custom_call.1} parent=1 // pred_fallthru
      _
    // Predicated region
    $region58: #{tpu_custom_call.1} parent=1 // pred_check
      _
    $region59: #{tpu_custom_call.1} parent=1 // pred_check_branch
      %112 = sbr.rel (0) target = $region61
    $region60: #{tpu_custom_call.1} parent=1 // pred_region
      %113 = dma.done [#allocation6], 512
    $region61: #{tpu_custom_call.1} parent=1 // pred_fallthru
      _
    // Predicated region
    $region62: #{tpu_custom_call.1} parent=1 // pred_check
      _
    $region63: #{tpu_custom_call.1} parent=1 // pred_check_branch
      %115 = sbr.rel (0) target = $region65
    $region64: #{tpu_custom_call.1} parent=1 // pred_region
      %116 = dma.done [#allocation9], 512
    $region65: #{tpu_custom_call.1} parent=1 // pred_fallthru
      _
    // Predicated region
    $region66: #{tpu_custom_call.1} parent=1 // pred_check
      _
    $region67: #{tpu_custom_call.1} parent=1 // pred_check_branch
      %118 = sbr.rel (0) target = $region69
    $region68: #{tpu_custom_call.1} parent=1 // pred_region
      %119 = dma.done [#allocation9], 512
    $region69: #{tpu_custom_call.1} parent=1 // pred_fallthru
      _
    // Predicated region
    $region70: #{tpu_custom_call.1} parent=1 // pred_check
      _
    $region71: #{tpu_custom_call.1} parent=1 // pred_check_branch
      %121 = sbr.rel (0) target = $region73
    $region72: #{tpu_custom_call.1} parent=1 // pred_region
      %122 = dma.done [#allocation12], 512
    $region73: #{tpu_custom_call.1} parent=1 // pred_fallthru
      _
    %v123 = vld [vmem:[%s0] sm:$0xff]
    %v124 = vld [vmem:[%s0 + $0x8] sm:$0xff]
    %v125 = vld [vmem:[%s0 + $0x10] sm:$0xff]
    %v126 = vld [vmem:[%s0 + $0x18] sm:$0xff]
    %v127 = vld [vmem:[#allocation3] sm:$0xff]
    %v128 = vld [vmem:[#allocation3 + $0x8] sm:$0xff]
    %v129 = vld [vmem:[#allocation3 + $0x10] sm:$0xff]
    %v130 = vld [vmem:[#allocation3 + $0x18] sm:$0xff]
    %v131 = vld [vmem:[#allocation5] sm:$0xff]
    %v132 = vld [vmem:[#allocation7] sm:$0xff]
    %v133 = vld [vmem:[#allocation7 + $0x8] sm:$0xff]
    %v134 = vld [vmem:[#allocation7 + $0x10] sm:$0xff]
    %v135 = vld [vmem:[#allocation7 + $0x18] sm:$0xff]
    %v136 = vld [vmem:[#allocation8] sm:$0xff]
    %v137 = vld [vmem:[#allocation8 + $0x8] sm:$0xff]
    %v138 = vld [vmem:[#allocation8 + $0x10] sm:$0xff]
    %v139 = vld [vmem:[#allocation8 + $0x18] sm:$0xff]
    %v140 = vld [vmem:[#allocation10] sm:$0xff]
    %v141 = vld [vmem:[#allocation10 + $0x8] sm:$0xff]
    %v142 = vld [vmem:[#allocation10 + $0x10] sm:$0xff]
    %v143 = vld [vmem:[#allocation10 + $0x18] sm:$0xff]
    %v144 = vld [vmem:[%s6] sm:$0x1]
    %v145 = vld [vmem:[#allocation11] sm:$0xff]
    %v146 = vld [vmem:[#allocation11 + $0x8] sm:$0xff]
    %v147 = vld [vmem:[#allocation11 + $0x10] sm:$0xff]
    %v148 = vld [vmem:[#allocation11 + $0x18] sm:$0xff]
    %v149 = vld [vmem:[%s8] sm:$0xff]
    %v150 = vld [vmem:[%s8 + $0x8] sm:$0xff]
    %v151 = vld [vmem:[%s8 + $0x10] sm:$0xff]
    %v152 = vld [vmem:[%s8 + $0x18] sm:$0xff]
    %v153 = vld [vmem:[%s9] sm:$0x1]
    %v154 = vld [vmem:[%s10] sm:$0xff]
    %v155 = vld [vmem:[%s10 + $0x8] sm:$0xff]
    %v156 = vld [vmem:[%s10 + $0x10] sm:$0xff]
    %v157 = vld [vmem:[%s10 + $0x18] sm:$0xff]
    %v158 = vld [vmem:[#allocation2] sm:$0x1]
    %vm159 = vcmask 261120
    %v161 = vsel %vm159, 0.0, 0
    %163 = vmatprep.subr.mxu0 0.0
    %164 = vmatpush1.msra.mxu0 %v136
    %165 = vmatprep.subr.mxu0 0.0
    %166 = vmatpush1.msra.mxu0 %v137
    %167 = vmatprep.subr.mxu0 0.0
    %168 = vmatpush1.msra.mxu0 %v138
    %169 = vmatprep.subr.mxu0 0.0
    %170 = vmatpush1.msra.mxu0 %v139
    %171 = vmatprep.subr.mxu0 0.0
    %172 = vmatpush1.msra.mxu0 0.0
    %173 = vmatprep.subr.mxu0 0.0
    %174 = vmatpush1.msra.mxu0 0.0
    %175 = vmatprep.subr.mxu0 0.0
    %176 = vmatpush1.msra.mxu0 0.0
    %177 = vmatprep.subr.mxu0 0.0
    %178 = vmatpush1.msra.mxu0 0.0
    %179 = vmatprep.subr.mxu0 0.0
    %180 = vmatpush1.msra.mxu0 0.0
    %181 = vmatprep.subr.mxu0 0.0
    %182 = vmatpush1.msra.mxu0 0.0
    %183 = vmatprep.subr.mxu0 0.0
    %184 = vmatpush1.msra.mxu0 0.0
    %185 = vmatprep.subr.mxu0 0.0
    %186 = vmatpush1.msra.mxu0 0.0
    %187 = vmatprep.subr.mxu0 0.0
    %188 = vmatpush1.msra.mxu0 0.0
    %189 = vmatprep.subr.mxu0 0.0
    %190 = vmatpush1.msra.mxu0 0.0
    %191 = vmatprep.subr.mxu0 0.0
    %192 = vmatpush1.msra.mxu0 0.0
    %193 = vmatprep.subr.mxu0 0.0
    %194 = vmatpush1.msra.mxu0 0.0
    %195 = vmatprep.subr.mxu0 0.0
    %196 = vmatpush1.msra.mxu0 0.0
    %197 = vmatprep.subr.mxu0 0.0
    %198 = vmatpush1.msra.mxu0 0.0
    %199 = vmatprep.subr.mxu0 0.0
    %200 = vmatpush1.msra.mxu0 0.0
    %201 = vmatprep.subr.mxu0 0.0
    %202 = vmatpush1.msra.mxu0 0.0
    %203 = vmatprep.subr.mxu0 0.0
    %204 = vmatpush1.msra.mxu0 0.0
    %205 = vmatprep.subr.mxu0 0.0
    %206 = vmatpush1.msra.mxu0 0.0
    %207 = vmatprep.subr.mxu0 0.0
    %208 = vmatpush1.msra.mxu0 0.0
    %209 = vmatprep.subr.mxu0 0.0
    %210 = vmatpush1.msra.mxu0 0.0
    %211 = vmatprep.subr.mxu0 0.0
    %212 = vmatpush1.msra.mxu0 0.0
    %213 = vmatprep.subr.mxu0 0.0
    %214 = vmatpush1.msra.mxu0 0.0
    %215 = vmatprep.subr.mxu0 0.0
    %216 = vmatpush1.msra.mxu0 0.0
    %217 = vmatprep.subr.mxu0 0.0
    %218 = vmatpush1.msra.mxu0 0.0
    %219 = vmatprep.subr.mxu0 0.0
    %220 = vmatpush1.msra.mxu0 0.0
    %221 = vmatprep.subr.mxu0 0.0
    %222 = vmatpush1.msra.mxu0 0.0
    %223 = vmatprep.subr.mxu0 0.0
    %224 = vmatpush1.msra.mxu0 0.0
    %225 = vmatprep.subr.mxu0 0.0
    %226 = vmatpush1.msra.mxu0 0.0
    %227 = vmatprep.mubr.f32.mxu0 0.0
    %228 = vmatmul.mubr.f32.gmra.mrb[0].mxu0 %v161
    %v229 = vpop.f32.mrb[0].mxu0
    %v230 = vadd.f32 0.0, %v229
    %v231 = vpop.f32.mrb[0].mxu0
    %232 = vdwg.mxu0
    %233 = vmatprep.subr.mxu0 0.0
    %234 = vmatpush1.msra.mxu0 %v132
    %235 = vmatprep.subr.mxu0 0.0
    %236 = vmatpush1.msra.mxu0 %v133
    %237 = vmatprep.subr.mxu0 0.0
    %238 = vmatpush1.msra.mxu0 %v134
    %239 = vmatprep.subr.mxu0 0.0
    %240 = vmatpush1.msra.mxu0 %v135
    %241 = vmatprep.subr.mxu0 0.0
    %242 = vmatpush1.msra.mxu0 0.0
    %243 = vmatprep.subr.mxu0 0.0
    %244 = vmatpush1.msra.mxu0 0.0
    %245 = vmatprep.subr.mxu0 0.0
    %246 = vmatpush1.msra.mxu0 0.0
    %247 = vmatprep.subr.mxu0 0.0
    %248 = vmatpush1.msra.mxu0 0.0
    %249 = vmatprep.subr.mxu0 0.0
    %250 = vmatpush1.msra.mxu0 0.0
    %251 = vmatprep.subr.mxu0 0.0
    %252 = vmatpush1.msra.mxu0 0.0
    %253 = vmatprep.subr.mxu0 0.0
    %254 = vmatpush1.msra.mxu0 0.0
    %255 = vmatprep.subr.mxu0 0.0
    %256 = vmatpush1.msra.mxu0 0.0
    %257 = vmatprep.subr.mxu0 0.0
    %258 = vmatpush1.msra.mxu0 0.0
    %259 = vmatprep.subr.mxu0 0.0
    %260 = vmatpush1.msra.mxu0 0.0
    %261 = vmatprep.subr.mxu0 0.0
    %262 = vmatpush1.msra.mxu0 0.0
    %263 = vmatprep.subr.mxu0 0.0
    %264 = vmatpush1.msra.mxu0 0.0
    %265 = vmatprep.subr.mxu0 0.0
    %266 = vmatpush1.msra.mxu0 0.0
    %267 = vmatprep.subr.mxu0 0.0
    %268 = vmatpush1.msra.mxu0 0.0
    %269 = vmatprep.subr.mxu0 0.0
    %270 = vmatpush1.msra.mxu0 0.0
    %271 = vmatprep.subr.mxu0 0.0
    %272 = vmatpush1.msra.mxu0 0.0
    %273 = vmatprep.subr.mxu0 0.0
    %274 = vmatpush1.msra.mxu0 0.0
    %275 = vmatprep.subr.mxu0 0.0
    %276 = vmatpush1.msra.mxu0 0.0
    %277 = vmatprep.subr.mxu0 0.0
    %278 = vmatpush1.msra.mxu0 0.0
    %279 = vmatprep.subr.mxu0 0.0
    %280 = vmatpush1.msra.mxu0 0.0
    %281 = vmatprep.subr.mxu0 0.0
    %282 = vmatpush1.msra.mxu0 0.0
    %283 = vmatprep.subr.mxu0 0.0
    %284 = vmatpush1.msra.mxu0 0.0
    %285 = vmatprep.subr.mxu0 0.0
    %286 = vmatpush1.msra.mxu0 0.0
    %287 = vmatprep.subr.mxu0 0.0
    %288 = vmatpush1.msra.mxu0 0.0
    %289 = vmatprep.subr.mxu0 0.0
    %290 = vmatpush1.msra.mxu0 0.0
    %291 = vmatprep.subr.mxu0 0.0
    %292 = vmatpush1.msra.mxu0 0.0
    %293 = vmatprep.subr.mxu0 0.0
    %294 = vmatpush1.msra.mxu0 0.0
    %295 = vmatprep.subr.mxu0 0.0
    %296 = vmatpush1.msra.mxu0 0.0
    %297 = vmatprep.mubr.f32.mxu0 0.0
    %298 = vmatmul.mubr.f32.gmra.mrb[0].mxu0 %v161
    %v299 = vpop.f32.mrb[0].mxu0
    %v300 = vadd.f32 %v230, %v299
    %v301 = vpop.f32.mrb[0].mxu0
    %302 = vdwg.mxu0
    %303 = vmatprep.subr.mxu0 0.0
    %304 = vmatpush1.msra.mxu0 %v140
    %305 = vmatprep.subr.mxu0 0.0
    %306 = vmatpush1.msra.mxu0 %v141
    %307 = vmatprep.subr.mxu0 0.0
    %308 = vmatpush1.msra.mxu0 %v142
    %309 = vmatprep.subr.mxu0 0.0
    %310 = vmatpush1.msra.mxu0 %v143
    %311 = vmatprep.subr.mxu0 0.0
    %312 = vmatpush1.msra.mxu0 0.0
    %313 = vmatprep.subr.mxu0 0.0
    %314 = vmatpush1.msra.mxu0 0.0
    %315 = vmatprep.subr.mxu0 0.0
    %316 = vmatpush1.msra.mxu0 0.0
    %317 = vmatprep.subr.mxu0 0.0
    %318 = vmatpush1.msra.mxu0 0.0
    %319 = vmatprep.subr.mxu0 0.0
    %320 = vmatpush1.msra.mxu0 0.0
    %321 = vmatprep.subr.mxu0 0.0
    %322 = vmatpush1.msra.mxu0 0.0
    %323 = vmatprep.subr.mxu0 0.0
    %324 = vmatpush1.msra.mxu0 0.0
    %325 = vmatprep.subr.mxu0 0.0
    %326 = vmatpush1.msra.mxu0 0.0
    %327 = vmatprep.subr.mxu0 0.0
    %328 = vmatpush1.msra.mxu0 0.0
    %329 = vmatprep.subr.mxu0 0.0
    %330 = vmatpush1.msra.mxu0 0.0
    %331 = vmatprep.subr.mxu0 0.0
    %332 = vmatpush1.msra.mxu0 0.0
    %333 = vmatprep.subr.mxu0 0.0
    %334 = vmatpush1.msra.mxu0 0.0
    %335 = vmatprep.subr.mxu0 0.0
    %336 = vmatpush1.msra.mxu0 0.0
    %337 = vmatprep.subr.mxu0 0.0
    %338 = vmatpush1.msra.mxu0 0.0
    %339 = vmatprep.subr.mxu0 0.0
    %340 = vmatpush1.msra.mxu0 0.0
    %341 = vmatprep.subr.mxu0 0.0
    %342 = vmatpush1.msra.mxu0 0.0
    %343 = vmatprep.subr.mxu0 0.0
    %344 = vmatpush1.msra.mxu0 0.0
    %345 = vmatprep.subr.mxu0 0.0
    %346 = vmatpush1.msra.mxu0 0.0
    %347 = vmatprep.subr.mxu0 0.0
    %348 = vmatpush1.msra.mxu0 0.0
    %349 = vmatprep.subr.mxu0 0.0
    %350 = vmatpush1.msra.mxu0 0.0
    %351 = vmatprep.subr.mxu0 0.0
    %352 = vmatpush1.msra.mxu0 0.0
    %353 = vmatprep.subr.mxu0 0.0
    %354 = vmatpush1.msra.mxu0 0.0
    %355 = vmatprep.subr.mxu0 0.0
    %356 = vmatpush1.msra.mxu0 0.0
    %357 = vmatprep.subr.mxu0 0.0
    %358 = vmatpush1.msra.mxu0 0.0
    %359 = vmatprep.subr.mxu0 0.0
    %360 = vmatpush1.msra.mxu0 0.0
    %361 = vmatprep.subr.mxu0 0.0
    %362 = vmatpush1.msra.mxu0 0.0
    %363 = vmatprep.subr.mxu0 0.0
    %364 = vmatpush1.msra.mxu0 0.0
    %365 = vmatprep.subr.mxu0 0.0
    %366 = vmatpush1.msra.mxu0 0.0
    %367 = vmatprep.mubr.f32.mxu0 0.0
    %368 = vmatmul.mubr.f32.gmra.mrb[0].mxu0 %v161
    %v369 = vpop.f32.mrb[0].mxu0
    %v370 = vadd.f32 0.0, %v369
    %v371 = vpop.f32.mrb[0].mxu0
    %372 = vdwg.mxu0
    %v373 = vadd.f32 %v300, %v370
    %v375 = vlaneseq
    %v376 = vshrl.u32 %v375, 7
    %v377 = vsub.s32 0, %v376
    %v378 = vrot.slane %v144, %v377
    %v380 = vadd.f32 %v373, %v378
    %v381 = vxor.u32 %v380, 2147483648
    %v382 = vmul.f32 %v381, 1.442695
    %v383 = vpow.pop %v382
    %v384 = vadd.f32 %v383, 1.0
    %v385 = vrcp.pop %v384
    %v386 = vmul.f32 1.0, %v385
    %v387 = vtanh.pop %v380
    %v388 = vmul.f32 %v386, 0.0
    %390 = vrot.lane.b32.xlu0 %v387, 64
    %v391 = vpop.permute.xlu0 %390
    %v393 = vmul.f32 %v386, %v391
    %395 = vrot.lane.b32.xlu0 %v393, 32
    %v396 = vpop.permute.xlu0 %395
    %v398 = vadd.f32 %v388, %v396
    %v399 = vtanh.pop %v398
    %401 = vrot.lane.b32.xlu0 %v399, 64
    %v402 = vpop.permute.xlu0 %401
    %v404 = vmul.f32 %v386, %v402
    %406 = vrot.lane.b32.xlu0 %v404, 32
    %v407 = vpop.permute.xlu0 %406
    %v408 = vsel %vm159, %v407, 0
    %410 = vmatprep.subr.mxu0 0.0
    %411 = vmatpush1.msra.mxu0 %v127
    %412 = vmatprep.subr.mxu0 0.0
    %413 = vmatpush1.msra.mxu0 %v128
    %414 = vmatprep.subr.mxu0 0.0
    %415 = vmatpush1.msra.mxu0 %v129
    %416 = vmatprep.subr.mxu0 0.0
    %417 = vmatpush1.msra.mxu0 %v130
    %418 = vmatprep.subr.mxu0 0.0
    %419 = vmatpush1.msra.mxu0 0.0
    %420 = vmatprep.subr.mxu0 0.0
    %421 = vmatpush1.msra.mxu0 0.0
    %422 = vmatprep.subr.mxu0 0.0
    %423 = vmatpush1.msra.mxu0 0.0
    %424 = vmatprep.subr.mxu0 0.0
    %425 = vmatpush1.msra.mxu0 0.0
    %426 = vmatprep.subr.mxu0 0.0
    %427 = vmatpush1.msra.mxu0 0.0
    %428 = vmatprep.subr.mxu0 0.0
    %429 = vmatpush1.msra.mxu0 0.0
    %430 = vmatprep.subr.mxu0 0.0
    %431 = vmatpush1.msra.mxu0 0.0
    %432 = vmatprep.subr.mxu0 0.0
    %433 = vmatpush1.msra.mxu0 0.0
    %434 = vmatprep.subr.mxu0 0.0
    %435 = vmatpush1.msra.mxu0 0.0
    %436 = vmatprep.subr.mxu0 0.0
    %437 = vmatpush1.msra.mxu0 0.0
    %438 = vmatprep.subr.mxu0 0.0
    %439 = vmatpush1.msra.mxu0 0.0
    %440 = vmatprep.subr.mxu0 0.0
    %441 = vmatpush1.msra.mxu0 0.0
    %442 = vmatprep.subr.mxu0 0.0
    %443 = vmatpush1.msra.mxu0 0.0
    %444 = vmatprep.subr.mxu0 0.0
    %445 = vmatpush1.msra.mxu0 0.0
    %446 = vmatprep.subr.mxu0 0.0
    %447 = vmatpush1.msra.mxu0 0.0
    %448 = vmatprep.subr.mxu0 0.0
    %449 = vmatpush1.msra.mxu0 0.0
    %450 = vmatprep.subr.mxu0 0.0
    %451 = vmatpush1.msra.mxu0 0.0
    %452 = vmatprep.subr.mxu0 0.0
    %453 = vmatpush1.msra.mxu0 0.0
    %454 = vmatprep.subr.mxu0 0.0
    %455 = vmatpush1.msra.mxu0 0.0
    %456 = vmatprep.subr.mxu0 0.0
    %457 = vmatpush1.msra.mxu0 0.0
    %458 = vmatprep.subr.mxu0 0.0
    %459 = vmatpush1.msra.mxu0 0.0
    %460 = vmatprep.subr.mxu0 0.0
    %461 = vmatpush1.msra.mxu0 0.0
    %462 = vmatprep.subr.mxu0 0.0
    %463 = vmatpush1.msra.mxu0 0.0
    %464 = vmatprep.subr.mxu0 0.0
    %465 = vmatpush1.msra.mxu0 0.0
    %466 = vmatprep.subr.mxu0 0.0
    %467 = vmatpush1.msra.mxu0 0.0
    %468 = vmatprep.subr.mxu0 0.0
    %469 = vmatpush1.msra.mxu0 0.0
    %470 = vmatprep.subr.mxu0 0.0
    %471 = vmatpush1.msra.mxu0 0.0
    %472 = vmatprep.subr.mxu0 0.0
    %473 = vmatpush1.msra.mxu0 0.0
    %474 = vmatprep.mubr.f32.mxu0 0.0
    %475 = vmatmul.mubr.f32.gmra.mrb[0].mxu0 %v408
    %v476 = vpop.f32.mrb[0].mxu0
    %v477 = vadd.f32 0.0, %v476
    %v478 = vpop.f32.mrb[0].mxu0
    %479 = vdwg.mxu0
    %vm480 = vcmp.ne.f32.partialorder %v131, 0.0
    %v481 = vsel %vm480, %v477, -1e+30
    %v482 = vsel %vm159, %v481, -inf
    %483 = vmax.xlane.f32.xlu0 %v482
    %v484 = vpop.xlane.xlu0 %483
    %v485 = vsub.f32 %v481, %v484
    %v486 = vmul.f32 %v485, 1.442695
    %v487 = vpow.pop %v486
    %v488 = vsel %vm159, %v487, 0.0
    %489 = vadd.xlane.f32.xlu0 %v488
    %v490 = vpop.xlane.xlu0 %489
    %v491 = vadd.f32 %v490, 1e-16
    %v492 = vrcp.pop %v491
    %v493 = vmul.f32 %v487, %v492
    %v495 = vsel %vm159, %v493, 0
    %497 = vmatprep.subr.mxu0 0.0
    %498 = vmatpush1.msra.mxu0 %v123
    %499 = vmatprep.subr.mxu0 0.0
    %500 = vmatpush1.msra.mxu0 %v124
    %501 = vmatprep.subr.mxu0 0.0
    %502 = vmatpush1.msra.mxu0 %v125
    %503 = vmatprep.subr.mxu0 0.0
    %504 = vmatpush1.msra.mxu0 %v126
    %505 = vmatprep.subr.mxu0 0.0
    %506 = vmatpush1.msra.mxu0 0.0
    %507 = vmatprep.subr.mxu0 0.0
    %508 = vmatpush1.msra.mxu0 0.0
    %509 = vmatprep.subr.mxu0 0.0
    %510 = vmatpush1.msra.mxu0 0.0
    %511 = vmatprep.subr.mxu0 0.0
    %512 = vmatpush1.msra.mxu0 0.0
    %513 = vmatprep.subr.mxu0 0.0
    %514 = vmatpush1.msra.mxu0 0.0
    %515 = vmatprep.subr.mxu0 0.0
    %516 = vmatpush1.msra.mxu0 0.0
    %517 = vmatprep.subr.mxu0 0.0
    %518 = vmatpush1.msra.mxu0 0.0
    %519 = vmatprep.subr.mxu0 0.0
    %520 = vmatpush1.msra.mxu0 0.0
    %521 = vmatprep.subr.mxu0 0.0
    %522 = vmatpush1.msra.mxu0 0.0
    %523 = vmatprep.subr.mxu0 0.0
    %524 = vmatpush1.msra.mxu0 0.0
    %525 = vmatprep.subr.mxu0 0.0
    %526 = vmatpush1.msra.mxu0 0.0
    %527 = vmatprep.subr.mxu0 0.0
    %528 = vmatpush1.msra.mxu0 0.0
    %529 = vmatprep.subr.mxu0 0.0
    %530 = vmatpush1.msra.mxu0 0.0
    %531 = vmatprep.subr.mxu0 0.0
    %532 = vmatpush1.msra.mxu0 0.0
    %533 = vmatprep.subr.mxu0 0.0
    %534 = vmatpush1.msra.mxu0 0.0
    %535 = vmatprep.subr.mxu0 0.0
    %536 = vmatpush1.msra.mxu0 0.0
    %537 = vmatprep.subr.mxu0 0.0
    %538 = vmatpush1.msra.mxu0 0.0
    %539 = vmatprep.subr.mxu0 0.0
    %540 = vmatpush1.msra.mxu0 0.0
    %541 = vmatprep.subr.mxu0 0.0
    %542 = vmatpush1.msra.mxu0 0.0
    %543 = vmatprep.subr.mxu0 0.0
    %544 = vmatpush1.msra.mxu0 0.0
    %545 = vmatprep.subr.mxu0 0.0
    %546 = vmatpush1.msra.mxu0 0.0
    %547 = vmatprep.subr.mxu0 0.0
    %548 = vmatpush1.msra.mxu0 0.0
    %549 = vmatprep.subr.mxu0 0.0
    %550 = vmatpush1.msra.mxu0 0.0
    %551 = vmatprep.subr.mxu0 0.0
    %552 = vmatpush1.msra.mxu0 0.0
    %553 = vmatprep.subr.mxu0 0.0
    %554 = vmatpush1.msra.mxu0 0.0
    %555 = vmatprep.subr.mxu0 0.0
    %556 = vmatpush1.msra.mxu0 0.0
    %557 = vmatprep.subr.mxu0 0.0
    %558 = vmatpush1.msra.mxu0 0.0
    %559 = vmatprep.subr.mxu0 0.0
    %560 = vmatpush1.msra.mxu0 0.0
    %561 = vmatprep.mubr.f32.mxu0 0.0
    %562 = vmatmul.mubr.f32.gmra.mrb[0].mxu0 %v495
    %v563 = vpop.f32.mrb[0].mxu0
    %v564 = vadd.f32 0.0, %v563
    %v565 = vpop.f32.mrb[0].mxu0
    %566 = vdwg.mxu0
    %v568 = vsel %vm159, %v564, 0
    %570 = vmatprep.subr.mxu0 0.0
    %571 = vmatpush1.msra.mxu0 %v136
    %572 = vmatprep.subr.mxu0 0.0
    %573 = vmatpush1.msra.mxu0 %v137
    %574 = vmatprep.subr.mxu0 0.0
    %575 = vmatpush1.msra.mxu0 %v138
    %576 = vmatprep.subr.mxu0 0.0
    %577 = vmatpush1.msra.mxu0 %v139
    %578 = vmatprep.subr.mxu0 0.0
    %579 = vmatpush1.msra.mxu0 0.0
    %580 = vmatprep.subr.mxu0 0.0
    %581 = vmatpush1.msra.mxu0 0.0
    %582 = vmatprep.subr.mxu0 0.0
    %583 = vmatpush1.msra.mxu0 0.0
    %584 = vmatprep.subr.mxu0 0.0
    %585 = vmatpush1.msra.mxu0 0.0
    %586 = vmatprep.subr.mxu0 0.0
    %587 = vmatpush1.msra.mxu0 0.0
    %588 = vmatprep.subr.mxu0 0.0
    %589 = vmatpush1.msra.mxu0 0.0
    %590 = vmatprep.subr.mxu0 0.0
    %591 = vmatpush1.msra.mxu0 0.0
    %592 = vmatprep.subr.mxu0 0.0
    %593 = vmatpush1.msra.mxu0 0.0
    %594 = vmatprep.subr.mxu0 0.0
    %595 = vmatpush1.msra.mxu0 0.0
    %596 = vmatprep.subr.mxu0 0.0
    %597 = vmatpush1.msra.mxu0 0.0
    %598 = vmatprep.subr.mxu0 0.0
    %599 = vmatpush1.msra.mxu0 0.0
    %600 = vmatprep.subr.mxu0 0.0
    %601 = vmatpush1.msra.mxu0 0.0
    %602 = vmatprep.subr.mxu0 0.0
    %603 = vmatpush1.msra.mxu0 0.0
    %604 = vmatprep.subr.mxu0 0.0
    %605 = vmatpush1.msra.mxu0 0.0
    %606 = vmatprep.subr.mxu0 0.0
    %607 = vmatpush1.msra.mxu0 0.0
    %608 = vmatprep.subr.mxu0 0.0
    %609 = vmatpush1.msra.mxu0 0.0
    %610 = vmatprep.subr.mxu0 0.0
    %611 = vmatpush1.msra.mxu0 0.0
    %612 = vmatprep.subr.mxu0 0.0
    %613 = vmatpush1.msra.mxu0 0.0
    %614 = vmatprep.subr.mxu0 0.0
    %615 = vmatpush1.msra.mxu0 0.0
    %616 = vmatprep.subr.mxu0 0.0
    %617 = vmatpush1.msra.mxu0 0.0
    %618 = vmatprep.subr.mxu0 0.0
    %619 = vmatpush1.msra.mxu0 0.0
    %620 = vmatprep.subr.mxu0 0.0
    %621 = vmatpush1.msra.mxu0 0.0
    %622 = vmatprep.subr.mxu0 0.0
    %623 = vmatpush1.msra.mxu0 0.0
    %624 = vmatprep.subr.mxu0 0.0
    %625 = vmatpush1.msra.mxu0 0.0
    %626 = vmatprep.subr.mxu0 0.0
    %627 = vmatpush1.msra.mxu0 0.0
    %628 = vmatprep.subr.mxu0 0.0
    %629 = vmatpush1.msra.mxu0 0.0
    %630 = vmatprep.subr.mxu0 0.0
    %631 = vmatpush1.msra.mxu0 0.0
    %632 = vmatprep.subr.mxu0 0.0
    %633 = vmatpush1.msra.mxu0 0.0
    %634 = vmatprep.mubr.f32.mxu0 0.0
    %635 = vmatmul.mubr.f32.gmra.mrb[0].mxu0 %v568
    %v636 = vpop.f32.mrb[0].mxu0
    %v637 = vadd.f32 0.0, %v636
    %v638 = vpop.f32.mrb[0].mxu0
    %639 = vdwg.mxu0
    %640 = vmatprep.subr.mxu0 0.0
    %641 = vmatpush1.msra.mxu0 %v132
    %642 = vmatprep.subr.mxu0 0.0
    %643 = vmatpush1.msra.mxu0 %v133
    %644 = vmatprep.subr.mxu0 0.0
    %645 = vmatpush1.msra.mxu0 %v134
    %646 = vmatprep.subr.mxu0 0.0
    %647 = vmatpush1.msra.mxu0 %v135
    %648 = vmatprep.subr.mxu0 0.0
    %649 = vmatpush1.msra.mxu0 0.0
    %650 = vmatprep.subr.mxu0 0.0
    %651 = vmatpush1.msra.mxu0 0.0
    %652 = vmatprep.subr.mxu0 0.0
    %653 = vmatpush1.msra.mxu0 0.0
    %654 = vmatprep.subr.mxu0 0.0
    %655 = vmatpush1.msra.mxu0 0.0
    %656 = vmatprep.subr.mxu0 0.0
    %657 = vmatpush1.msra.mxu0 0.0
    %658 = vmatprep.subr.mxu0 0.0
    %659 = vmatpush1.msra.mxu0 0.0
    %660 = vmatprep.subr.mxu0 0.0
    %661 = vmatpush1.msra.mxu0 0.0
    %662 = vmatprep.subr.mxu0 0.0
    %663 = vmatpush1.msra.mxu0 0.0
    %664 = vmatprep.subr.mxu0 0.0
    %665 = vmatpush1.msra.mxu0 0.0
    %666 = vmatprep.subr.mxu0 0.0
    %667 = vmatpush1.msra.mxu0 0.0
    %668 = vmatprep.subr.mxu0 0.0
    %669 = vmatpush1.msra.mxu0 0.0
    %670 = vmatprep.subr.mxu0 0.0
    %671 = vmatpush1.msra.mxu0 0.0
    %672 = vmatprep.subr.mxu0 0.0
    %673 = vmatpush1.msra.mxu0 0.0
    %674 = vmatprep.subr.mxu0 0.0
    %675 = vmatpush1.msra.mxu0 0.0
    %676 = vmatprep.subr.mxu0 0.0
    %677 = vmatpush1.msra.mxu0 0.0
    %678 = vmatprep.subr.mxu0 0.0
    %679 = vmatpush1.msra.mxu0 0.0
    %680 = vmatprep.subr.mxu0 0.0
    %681 = vmatpush1.msra.mxu0 0.0
    %682 = vmatprep.subr.mxu0 0.0
    %683 = vmatpush1.msra.mxu0 0.0
    %684 = vmatprep.subr.mxu0 0.0
    %685 = vmatpush1.msra.mxu0 0.0
    %686 = vmatprep.subr.mxu0 0.0
    %687 = vmatpush1.msra.mxu0 0.0
    %688 = vmatprep.subr.mxu0 0.0
    %689 = vmatpush1.msra.mxu0 0.0
    %690 = vmatprep.subr.mxu0 0.0
    %691 = vmatpush1.msra.mxu0 0.0
    %692 = vmatprep.subr.mxu0 0.0
    %693 = vmatpush1.msra.mxu0 0.0
    %694 = vmatprep.subr.mxu0 0.0
    %695 = vmatpush1.msra.mxu0 0.0
    %696 = vmatprep.subr.mxu0 0.0
    %697 = vmatpush1.msra.mxu0 0.0
    %698 = vmatprep.subr.mxu0 0.0
    %699 = vmatpush1.msra.mxu0 0.0
    %700 = vmatprep.subr.mxu0 0.0
    %701 = vmatpush1.msra.mxu0 0.0
    %702 = vmatprep.subr.mxu0 0.0
    %703 = vmatpush1.msra.mxu0 0.0
    %704 = vmatprep.mubr.f32.mxu0 0.0
    %705 = vmatmul.mubr.f32.gmra.mrb[0].mxu0 %v408
    %v706 = vpop.f32.mrb[0].mxu0
    %v707 = vadd.f32 %v637, %v706
    %v708 = vpop.f32.mrb[0].mxu0
    %709 = vdwg.mxu0
    %710 = vmatprep.subr.mxu0 0.0
    %711 = vmatpush1.msra.mxu0 %v140
    %712 = vmatprep.subr.mxu0 0.0
    %713 = vmatpush1.msra.mxu0 %v141
    %714 = vmatprep.subr.mxu0 0.0
    %715 = vmatpush1.msra.mxu0 %v142
    %716 = vmatprep.subr.mxu0 0.0
    %717 = vmatpush1.msra.mxu0 %v143
    %718 = vmatprep.subr.mxu0 0.0
    %719 = vmatpush1.msra.mxu0 0.0
    %720 = vmatprep.subr.mxu0 0.0
    %721 = vmatpush1.msra.mxu0 0.0
    %722 = vmatprep.subr.mxu0 0.0
    %723 = vmatpush1.msra.mxu0 0.0
    %724 = vmatprep.subr.mxu0 0.0
    %725 = vmatpush1.msra.mxu0 0.0
    %726 = vmatprep.subr.mxu0 0.0
    %727 = vmatpush1.msra.mxu0 0.0
    %728 = vmatprep.subr.mxu0 0.0
    %729 = vmatpush1.msra.mxu0 0.0
    %730 = vmatprep.subr.mxu0 0.0
    %731 = vmatpush1.msra.mxu0 0.0
    %732 = vmatprep.subr.mxu0 0.0
    %733 = vmatpush1.msra.mxu0 0.0
    %734 = vmatprep.subr.mxu0 0.0
    %735 = vmatpush1.msra.mxu0 0.0
    %736 = vmatprep.subr.mxu0 0.0
    %737 = vmatpush1.msra.mxu0 0.0
    %738 = vmatprep.subr.mxu0 0.0
    %739 = vmatpush1.msra.mxu0 0.0
    %740 = vmatprep.subr.mxu0 0.0
    %741 = vmatpush1.msra.mxu0 0.0
    %742 = vmatprep.subr.mxu0 0.0
    %743 = vmatpush1.msra.mxu0 0.0
    %744 = vmatprep.subr.mxu0 0.0
    %745 = vmatpush1.msra.mxu0 0.0
    %746 = vmatprep.subr.mxu0 0.0
    %747 = vmatpush1.msra.mxu0 0.0
    %748 = vmatprep.subr.mxu0 0.0
    %749 = vmatpush1.msra.mxu0 0.0
    %750 = vmatprep.subr.mxu0 0.0
    %751 = vmatpush1.msra.mxu0 0.0
    %752 = vmatprep.subr.mxu0 0.0
    %753 = vmatpush1.msra.mxu0 0.0
    %754 = vmatprep.subr.mxu0 0.0
    %755 = vmatpush1.msra.mxu0 0.0
    %756 = vmatprep.subr.mxu0 0.0
    %757 = vmatpush1.msra.mxu0 0.0
    %758 = vmatprep.subr.mxu0 0.0
    %759 = vmatpush1.msra.mxu0 0.0
    %760 = vmatprep.subr.mxu0 0.0
    %761 = vmatpush1.msra.mxu0 0.0
    %762 = vmatprep.subr.mxu0 0.0
    %763 = vmatpush1.msra.mxu0 0.0
    %764 = vmatprep.subr.mxu0 0.0
    %765 = vmatpush1.msra.mxu0 0.0
    %766 = vmatprep.subr.mxu0 0.0
    %767 = vmatpush1.msra.mxu0 0.0
    %768 = vmatprep.subr.mxu0 0.0
    %769 = vmatpush1.msra.mxu0 0.0
    %770 = vmatprep.subr.mxu0 0.0
    %771 = vmatpush1.msra.mxu0 0.0
    %772 = vmatprep.subr.mxu0 0.0
    %773 = vmatpush1.msra.mxu0 0.0
    %774 = vmatprep.mubr.f32.mxu0 0.0
    %775 = vmatmul.mubr.f32.gmra.mrb[0].mxu0 %v408
    %v776 = vpop.f32.mrb[0].mxu0
    %v777 = vadd.f32 0.0, %v776
    %v778 = vpop.f32.mrb[0].mxu0
    %779 = vdwg.mxu0
    %v780 = vadd.f32 %v707, %v777
    %v781 = vadd.f32 %v780, %v378
    %v782 = vxor.u32 %v781, 2147483648
    %v783 = vmul.f32 %v782, 1.442695
    %v784 = vpow.pop %v783
    %v785 = vadd.f32 %v784, 1.0
    %v786 = vrcp.pop %v785
    %v787 = vmul.f32 1.0, %v786
    %v788 = vtanh.pop %v781
    %v789 = vmul.f32 %v787, %v398
    %791 = vrot.lane.b32.xlu0 %v788, 64
    %v792 = vpop.permute.xlu0 %791
    %v794 = vmul.f32 %v787, %v792
    %796 = vrot.lane.b32.xlu0 %v794, 32
    %v797 = vpop.permute.xlu0 %796
    %v799 = vadd.f32 %v789, %v797
    %v800 = vtanh.pop %v799
    %802 = vrot.lane.b32.xlu0 %v800, 64
    %v803 = vpop.permute.xlu0 %802
    %v805 = vmul.f32 %v787, %v803
    %807 = vrot.lane.b32.xlu0 %v805, 32
    %v808 = vpop.permute.xlu0 %807
    %v809 = vsel %vm159, %v808, 0
    %811 = vmatprep.subr.mxu0 0.0
    %812 = vmatpush1.msra.mxu0 %v127
    %813 = vmatprep.subr.mxu0 0.0
    %814 = vmatpush1.msra.mxu0 %v128
    %815 = vmatprep.subr.mxu0 0.0
    %816 = vmatpush1.msra.mxu0 %v129
    %817 = vmatprep.subr.mxu0 0.0
    %818 = vmatpush1.msra.mxu0 %v130
    %819 = vmatprep.subr.mxu0 0.0
    %820 = vmatpush1.msra.mxu0 0.0
    %821 = vmatprep.subr.mxu0 0.0
    %822 = vmatpush1.msra.mxu0 0.0
    %823 = vmatprep.subr.mxu0 0.0
    %824 = vmatpush1.msra.mxu0 0.0
    %825 = vmatprep.subr.mxu0 0.0
    %826 = vmatpush1.msra.mxu0 0.0
    %827 = vmatprep.subr.mxu0 0.0
    %828 = vmatpush1.msra.mxu0 0.0
    %829 = vmatprep.subr.mxu0 0.0
    %830 = vmatpush1.msra.mxu0 0.0
    %831 = vmatprep.subr.mxu0 0.0
    %832 = vmatpush1.msra.mxu0 0.0
    %833 = vmatprep.subr.mxu0 0.0
    %834 = vmatpush1.msra.mxu0 0.0
    %835 = vmatprep.subr.mxu0 0.0
    %836 = vmatpush1.msra.mxu0 0.0
    %837 = vmatprep.subr.mxu0 0.0
    %838 = vmatpush1.msra.mxu0 0.0
    %839 = vmatprep.subr.mxu0 0.0
    %840 = vmatpush1.msra.mxu0 0.0
    %841 = vmatprep.subr.mxu0 0.0
    %842 = vmatpush1.msra.mxu0 0.0
    %843 = vmatprep.subr.mxu0 0.0
    %844 = vmatpush1.msra.mxu0 0.0
    %845 = vmatprep.subr.mxu0 0.0
    %846 = vmatpush1.msra.mxu0 0.0
    %847 = vmatprep.subr.mxu0 0.0
    %848 = vmatpush1.msra.mxu0 0.0
    %849 = vmatprep.subr.mxu0 0.0
    %850 = vmatpush1.msra.mxu0 0.0
    %851 = vmatprep.subr.mxu0 0.0
    %852 = vmatpush1.msra.mxu0 0.0
    %853 = vmatprep.subr.mxu0 0.0
    %854 = vmatpush1.msra.mxu0 0.0
    %855 = vmatprep.subr.mxu0 0.0
    %856 = vmatpush1.msra.mxu0 0.0
    %857 = vmatprep.subr.mxu0 0.0
    %858 = vmatpush1.msra.mxu0 0.0
    %859 = vmatprep.subr.mxu0 0.0
    %860 = vmatpush1.msra.mxu0 0.0
    %861 = vmatprep.subr.mxu0 0.0
    %862 = vmatpush1.msra.mxu0 0.0
    %863 = vmatprep.subr.mxu0 0.0
    %864 = vmatpush1.msra.mxu0 0.0
    %865 = vmatprep.subr.mxu0 0.0
    %866 = vmatpush1.msra.mxu0 0.0
    %867 = vmatprep.subr.mxu0 0.0
    %868 = vmatpush1.msra.mxu0 0.0
    %869 = vmatprep.subr.mxu0 0.0
    %870 = vmatpush1.msra.mxu0 0.0
    %871 = vmatprep.subr.mxu0 0.0
    %872 = vmatpush1.msra.mxu0 0.0
    %873 = vmatprep.subr.mxu0 0.0
    %874 = vmatpush1.msra.mxu0 0.0
    %875 = vmatprep.mubr.f32.mxu0 0.0
    %876 = vmatmul.mubr.f32.gmra.mrb[0].mxu0 %v809
    %v877 = vpop.f32.mrb[0].mxu0
    %v878 = vadd.f32 0.0, %v877
    %v879 = vpop.f32.mrb[0].mxu0
    %880 = vdwg.mxu0
    %v881 = vsel %vm480, %v878, -1e+30
    %v882 = vsel %vm159, %v881, -inf
    %883 = vmax.xlane.f32.xlu0 %v882
    %v884 = vpop.xlane.xlu0 %883
    %v885 = vsub.f32 %v881, %v884
    %v886 = vmul.f32 %v885, 1.442695
    %v887 = vpow.pop %v886
    %v888 = vsel %vm159, %v887, 0.0
    %889 = vadd.xlane.f32.xlu0 %v888
    %v890 = vpop.xlane.xlu0 %889
    %v891 = vadd.f32 %v890, 1e-16
    %v892 = vrcp.pop %v891
    %v893 = vmul.f32 %v887, %v892
    %v895 = vsel %vm159, %v893, 0
    %897 = vmatprep.subr.mxu0 0.0
    %898 = vmatpush1.msra.mxu0 %v123
    %899 = vmatprep.subr.mxu0 0.0
    %900 = vmatpush1.msra.mxu0 %v124
    %901 = vmatprep.subr.mxu0 0.0
    %902 = vmatpush1.msra.mxu0 %v125
    %903 = vmatprep.subr.mxu0 0.0
    %904 = vmatpush1.msra.mxu0 %v126
    %905 = vmatprep.subr.mxu0 0.0
    %906 = vmatpush1.msra.mxu0 0.0
    %907 = vmatprep.subr.mxu0 0.0
    %908 = vmatpush1.msra.mxu0 0.0
    %909 = vmatprep.subr.mxu0 0.0
    %910 = vmatpush1.msra.mxu0 0.0
    %911 = vmatprep.subr.mxu0 0.0
    %912 = vmatpush1.msra.mxu0 0.0
    %913 = vmatprep.subr.mxu0 0.0
    %914 = vmatpush1.msra.mxu0 0.0
    %915 = vmatprep.subr.mxu0 0.0
    %916 = vmatpush1.msra.mxu0 0.0
    %917 = vmatprep.subr.mxu0 0.0
    %918 = vmatpush1.msra.mxu0 0.0
    %919 = vmatprep.subr.mxu0 0.0
    %920 = vmatpush1.msra.mxu0 0.0
    %921 = vmatprep.subr.mxu0 0.0
    %922 = vmatpush1.msra.mxu0 0.0
    %923 = vmatprep.subr.mxu0 0.0
    %924 = vmatpush1.msra.mxu0 0.0
    %925 = vmatprep.subr.mxu0 0.0
    %926 = vmatpush1.msra.mxu0 0.0
    %927 = vmatprep.subr.mxu0 0.0
    %928 = vmatpush1.msra.mxu0 0.0
    %929 = vmatprep.subr.mxu0 0.0
    %930 = vmatpush1.msra.mxu0 0.0
    %931 = vmatprep.subr.mxu0 0.0
    %932 = vmatpush1.msra.mxu0 0.0
    %933 = vmatprep.subr.mxu0 0.0
    %934 = vmatpush1.msra.mxu0 0.0
    %935 = vmatprep.subr.mxu0 0.0
    %936 = vmatpush1.msra.mxu0 0.0
    %937 = vmatprep.subr.mxu0 0.0
    %938 = vmatpush1.msra.mxu0 0.0
    %939 = vmatprep.subr.mxu0 0.0
    %940 = vmatpush1.msra.mxu0 0.0
    %941 = vmatprep.subr.mxu0 0.0
    %942 = vmatpush1.msra.mxu0 0.0
    %943 = vmatprep.subr.mxu0 0.0
    %944 = vmatpush1.msra.mxu0 0.0
    %945 = vmatprep.subr.mxu0 0.0
    %946 = vmatpush1.msra.mxu0 0.0
    %947 = vmatprep.subr.mxu0 0.0
    %948 = vmatpush1.msra.mxu0 0.0
    %949 = vmatprep.subr.mxu0 0.0
    %950 = vmatpush1.msra.mxu0 0.0
    %951 = vmatprep.subr.mxu0 0.0
    %952 = vmatpush1.msra.mxu0 0.0
    %953 = vmatprep.subr.mxu0 0.0
    %954 = vmatpush1.msra.mxu0 0.0
    %955 = vmatprep.subr.mxu0 0.0
    %956 = vmatpush1.msra.mxu0 0.0
    %957 = vmatprep.subr.mxu0 0.0
    %958 = vmatpush1.msra.mxu0 0.0
    %959 = vmatprep.subr.mxu0 0.0
    %960 = vmatpush1.msra.mxu0 0.0
    %961 = vmatprep.mubr.f32.mxu0 0.0
    %962 = vmatmul.mubr.f32.gmra.mrb[0].mxu0 %v895
    %v963 = vpop.f32.mrb[0].mxu0
    %v964 = vadd.f32 0.0, %v963
    %v965 = vpop.f32.mrb[0].mxu0
    %966 = vdwg.mxu0
    %v968 = vsel %vm159, %v964, 0
    %970 = vmatprep.subr.mxu0 0.0
    %971 = vmatpush1.msra.mxu0 %v149
    %972 = vmatprep.subr.mxu0 0.0
    %973 = vmatpush1.msra.mxu0 %v150
    %974 = vmatprep.subr.mxu0 0.0
    %975 = vmatpush1.msra.mxu0 %v151
    %976 = vmatprep.subr.mxu0 0.0
    %977 = vmatpush1.msra.mxu0 %v152
    %978 = vmatprep.subr.mxu0 0.0
    %979 = vmatpush1.msra.mxu0 0.0
    %980 = vmatprep.subr.mxu0 0.0
    %981 = vmatpush1.msra.mxu0 0.0
    %982 = vmatprep.subr.mxu0 0.0
    %983 = vmatpush1.msra.mxu0 0.0
    %984 = vmatprep.subr.mxu0 0.0
    %985 = vmatpush1.msra.mxu0 0.0
    %986 = vmatprep.subr.mxu0 0.0
    %987 = vmatpush1.msra.mxu0 0.0
    %988 = vmatprep.subr.mxu0 0.0
    %989 = vmatpush1.msra.mxu0 0.0
    %990 = vmatprep.subr.mxu0 0.0
    %991 = vmatpush1.msra.mxu0 0.0
    %992 = vmatprep.subr.mxu0 0.0
    %993 = vmatpush1.msra.mxu0 0.0
    %994 = vmatprep.subr.mxu0 0.0
    %995 = vmatpush1.msra.mxu0 0.0
    %996 = vmatprep.subr.mxu0 0.0
    %997 = vmatpush1.msra.mxu0 0.0
    %998 = vmatprep.subr.mxu0 0.0
    %999 = vmatpush1.msra.mxu0 0.0
    %1000 = vmatprep.subr.mxu0 0.0
    %1001 = vmatpush1.msra.mxu0 0.0
    %1002 = vmatprep.subr.mxu0 0.0
    %1003 = vmatpush1.msra.mxu0 0.0
    %1004 = vmatprep.subr.mxu0 0.0
    %1005 = vmatpush1.msra.mxu0 0.0
    %1006 = vmatprep.subr.mxu0 0.0
    %1007 = vmatpush1.msra.mxu0 0.0
    %1008 = vmatprep.subr.mxu0 0.0
    %1009 = vmatpush1.msra.mxu0 0.0
    %1010 = vmatprep.subr.mxu0 0.0
    %1011 = vmatpush1.msra.mxu0 0.0
    %1012 = vmatprep.subr.mxu0 0.0
    %1013 = vmatpush1.msra.mxu0 0.0
    %1014 = vmatprep.subr.mxu0 0.0
    %1015 = vmatpush1.msra.mxu0 0.0
    %1016 = vmatprep.subr.mxu0 0.0
    %1017 = vmatpush1.msra.mxu0 0.0
    %1018 = vmatprep.subr.mxu0 0.0
    %1019 = vmatpush1.msra.mxu0 0.0
    %1020 = vmatprep.subr.mxu0 0.0
    %1021 = vmatpush1.msra.mxu0 0.0
    %1022 = vmatprep.subr.mxu0 0.0
    %1023 = vmatpush1.msra.mxu0 0.0
    %1024 = vmatprep.subr.mxu0 0.0
    %1025 = vmatpush1.msra.mxu0 0.0
    %1026 = vmatprep.subr.mxu0 0.0
    %1027 = vmatpush1.msra.mxu0 0.0
    %1028 = vmatprep.subr.mxu0 0.0
    %1029 = vmatpush1.msra.mxu0 0.0
    %1030 = vmatprep.subr.mxu0 0.0
    %1031 = vmatpush1.msra.mxu0 0.0
    %1032 = vmatprep.subr.mxu0 0.0
    %1033 = vmatpush1.msra.mxu0 0.0
    %1034 = vmatprep.mubr.f32.mxu0 0.0
    %1035 = vmatmul.mubr.f32.gmra.mrb[0].mxu0 %v968
    %v1036 = vpop.f32.mrb[0].mxu0
    %v1037 = vadd.f32 0.0, %v1036
    %v1038 = vpop.f32.mrb[0].mxu0
    %1039 = vdwg.mxu0
    %1040 = vmatprep.subr.mxu0 0.0
    %1041 = vmatpush1.msra.mxu0 %v145
    %1042 = vmatprep.subr.mxu0 0.0
    %1043 = vmatpush1.msra.mxu0 %v146
    %1044 = vmatprep.subr.mxu0 0.0
    %1045 = vmatpush1.msra.mxu0 %v147
    %1046 = vmatprep.subr.mxu0 0.0
    %1047 = vmatpush1.msra.mxu0 %v148
    %1048 = vmatprep.subr.mxu0 0.0
    %1049 = vmatpush1.msra.mxu0 0.0
    %1050 = vmatprep.subr.mxu0 0.0
    %1051 = vmatpush1.msra.mxu0 0.0
    %1052 = vmatprep.subr.mxu0 0.0
    %1053 = vmatpush1.msra.mxu0 0.0
    %1054 = vmatprep.subr.mxu0 0.0
    %1055 = vmatpush1.msra.mxu0 0.0
    %1056 = vmatprep.subr.mxu0 0.0
    %1057 = vmatpush1.msra.mxu0 0.0
    %1058 = vmatprep.subr.mxu0 0.0
    %1059 = vmatpush1.msra.mxu0 0.0
    %1060 = vmatprep.subr.mxu0 0.0
    %1061 = vmatpush1.msra.mxu0 0.0
    %1062 = vmatprep.subr.mxu0 0.0
    %1063 = vmatpush1.msra.mxu0 0.0
    %1064 = vmatprep.subr.mxu0 0.0
    %1065 = vmatpush1.msra.mxu0 0.0
    %1066 = vmatprep.subr.mxu0 0.0
    %1067 = vmatpush1.msra.mxu0 0.0
    %1068 = vmatprep.subr.mxu0 0.0
    %1069 = vmatpush1.msra.mxu0 0.0
    %1070 = vmatprep.subr.mxu0 0.0
    %1071 = vmatpush1.msra.mxu0 0.0
    %1072 = vmatprep.subr.mxu0 0.0
    %1073 = vmatpush1.msra.mxu0 0.0
    %1074 = vmatprep.subr.mxu0 0.0
    %1075 = vmatpush1.msra.mxu0 0.0
    %1076 = vmatprep.subr.mxu0 0.0
    %1077 = vmatpush1.msra.mxu0 0.0
    %1078 = vmatprep.subr.mxu0 0.0
    %1079 = vmatpush1.msra.mxu0 0.0
    %1080 = vmatprep.subr.mxu0 0.0
    %1081 = vmatpush1.msra.mxu0 0.0
    %1082 = vmatprep.subr.mxu0 0.0
    %1083 = vmatpush1.msra.mxu0 0.0
    %1084 = vmatprep.subr.mxu0 0.0
    %1085 = vmatpush1.msra.mxu0 0.0
    %1086 = vmatprep.subr.mxu0 0.0
    %1087 = vmatpush1.msra.mxu0 0.0
    %1088 = vmatprep.subr.mxu0 0.0
    %1089 = vmatpush1.msra.mxu0 0.0
    %1090 = vmatprep.subr.mxu0 0.0
    %1091 = vmatpush1.msra.mxu0 0.0
    %1092 = vmatprep.subr.mxu0 0.0
    %1093 = vmatpush1.msra.mxu0 0.0
    %1094 = vmatprep.subr.mxu0 0.0
    %1095 = vmatpush1.msra.mxu0 0.0
    %1096 = vmatprep.subr.mxu0 0.0
    %1097 = vmatpush1.msra.mxu0 0.0
    %1098 = vmatprep.subr.mxu0 0.0
    %1099 = vmatpush1.msra.mxu0 0.0
    %1100 = vmatprep.subr.mxu0 0.0
    %1101 = vmatpush1.msra.mxu0 0.0
    %1102 = vmatprep.subr.mxu0 0.0
    %1103 = vmatpush1.msra.mxu0 0.0
    %1104 = vmatprep.mubr.f32.mxu0 0.0
    %1105 = vmatmul.mubr.f32.gmra.mrb[0].mxu0 %v809
    %v1106 = vpop.f32.mrb[0].mxu0
    %v1107 = vadd.f32 %v1037, %v1106
    %v1108 = vpop.f32.mrb[0].mxu0
    %1109 = vdwg.mxu0
    %v1111 = vlaneseq
    %v1112 = vshrl.u32 %v1111, 7
    %v1113 = vsub.s32 0, %v1112
    %v1114 = vrot.slane %v153, %v1113
    %v1116 = vadd.f32 %v1107, %v1114
    %v1117 = vmax.f32 %v1116, 0.0
    %v1119 = vlaneseq
    %v1120 = vshrl.u32 %v1119, 7
    %v1121 = vsub.s32 0, %v1120
    %v1122 = vrot.slane %v158, %v1121
    %v1125 = vsel %vm159, %v1117, 0
    %1127 = vmatprep.subr.mxu0 0.0
    %1128 = vmatpush1.msra.mxu0 %v154
    %1129 = vmatprep.subr.mxu0 0.0
    %1130 = vmatpush1.msra.mxu0 %v155
    %1131 = vmatprep.subr.mxu0 0.0
    %1132 = vmatpush1.msra.mxu0 %v156
    %1133 = vmatprep.subr.mxu0 0.0
    %1134 = vmatpush1.msra.mxu0 %v157
    %1135 = vmatprep.subr.mxu0 0.0
    %1136 = vmatpush1.msra.mxu0 0.0
    %1137 = vmatprep.subr.mxu0 0.0
    %1138 = vmatpush1.msra.mxu0 0.0
    %1139 = vmatprep.subr.mxu0 0.0
    %1140 = vmatpush1.msra.mxu0 0.0
    %1141 = vmatprep.subr.mxu0 0.0
    %1142 = vmatpush1.msra.mxu0 0.0
    %1143 = vmatprep.subr.mxu0 0.0
    %1144 = vmatpush1.msra.mxu0 0.0
    %1145 = vmatprep.subr.mxu0 0.0
    %1146 = vmatpush1.msra.mxu0 0.0
    %1147 = vmatprep.subr.mxu0 0.0
    %1148 = vmatpush1.msra.mxu0 0.0
    %1149 = vmatprep.subr.mxu0 0.0
    %1150 = vmatpush1.msra.mxu0 0.0
    %1151 = vmatprep.subr.mxu0 0.0
    %1152 = vmatpush1.msra.mxu0 0.0
    %1153 = vmatprep.subr.mxu0 0.0
    %1154 = vmatpush1.msra.mxu0 0.0
    %1155 = vmatprep.subr.mxu0 0.0
    %1156 = vmatpush1.msra.mxu0 0.0
    %1157 = vmatprep.subr.mxu0 0.0
    %1158 = vmatpush1.msra.mxu0 0.0
    %1159 = vmatprep.subr.mxu0 0.0
    %1160 = vmatpush1.msra.mxu0 0.0
    %1161 = vmatprep.subr.mxu0 0.0
    %1162 = vmatpush1.msra.mxu0 0.0
    %1163 = vmatprep.subr.mxu0 0.0
    %1164 = vmatpush1.msra.mxu0 0.0
    %1165 = vmatprep.subr.mxu0 0.0
    %1166 = vmatpush1.msra.mxu0 0.0
    %1167 = vmatprep.subr.mxu0 0.0
    %1168 = vmatpush1.msra.mxu0 0.0
    %1169 = vmatprep.subr.mxu0 0.0
    %1170 = vmatpush1.msra.mxu0 0.0
    %1171 = vmatprep.subr.mxu0 0.0
    %1172 = vmatpush1.msra.mxu0 0.0
    %1173 = vmatprep.subr.mxu0 0.0
    %1174 = vmatpush1.msra.mxu0 0.0
    %1175 = vmatprep.subr.mxu0 0.0
    %1176 = vmatpush1.msra.mxu0 0.0
    %1177 = vmatprep.subr.mxu0 0.0
    %1178 = vmatpush1.msra.mxu0 0.0
    %1179 = vmatprep.subr.mxu0 0.0
    %1180 = vmatpush1.msra.mxu0 0.0
    %1181 = vmatprep.subr.mxu0 0.0
    %1182 = vmatpush1.msra.mxu0 0.0
    %1183 = vmatprep.subr.mxu0 0.0
    %1184 = vmatpush1.msra.mxu0 0.0
    %1185 = vmatprep.subr.mxu0 0.0
    %1186 = vmatpush1.msra.mxu0 0.0
    %1187 = vmatprep.subr.mxu0 0.0
    %1188 = vmatpush1.msra.mxu0 0.0
    %1189 = vmatprep.subr.mxu0 0.0
    %1190 = vmatpush1.msra.mxu0 0.0
    %1191 = vmatprep.mubr.f32.mxu0 0.0
    %1192 = vmatmul.mubr.f32.gmra.mrb[0].mxu0 %v1125
    %v1193 = vpop.f32.mrb[0].mxu0
    %v1194 = vadd.f32 %v1122, %v1193
    %v1195 = vpop.f32.mrb[0].mxu0
    %1196 = vdwg.mxu0
    %vm1197 = vcmask 7168
    %1198 = vst.msk [vmem:[%s12] sm:$0xff] %vm1197, %v1194
    // Predicated region
    $region74: #{tpu_custom_call.1} parent=1 // pred_check
      _
    $region75: #{tpu_custom_call.1} parent=1 // pred_check_branch
      %1200 = sbr.rel (0) target = $region77
    $region76: #{tpu_custom_call.1} parent=1 // pred_region
      _
    $region77: #{tpu_custom_call.1} parent=1 // pred_fallthru
      _
    // Predicated region
    $region78: #{tpu_custom_call.1} parent=1 // pred_check
      _
    $region79: #{tpu_custom_call.1} parent=1 // pred_check_branch
      %1202 = sbr.rel (0) target = $region81
    $region80: #{tpu_custom_call.1} parent=1 // pred_region
      _
    $region81: #{tpu_custom_call.1} parent=1 // pred_fallthru
      _
    %1203 = vsyncpa [#allocation4], 1
    %1204 = vsyncpa [#allocation6], 1
    %1205 = vsyncpa [#allocation9], 1
    %1206 = vsyncpa [#allocation12], 1

</llo_original>
